<compile_context>
chip_gen: v5e
topology: v5e:2x2
jax: 0.10.0
libtpu: 0.0.40
codegen_flags: <defaults>
</compile_context>

<pallas_src>
import functools

import jax
import jax.numpy as jnp
from jax.experimental import pallas as pl
from jax.experimental.pallas import tpu as pltpu

OUT_W = 128  # lane-dense packed-output width


def _softplus(x):
    # Numerically stable softplus (matches torch.nn.Softplus, beta=1).
    return jnp.maximum(x, 0.0) + jnp.log(1.0 + jnp.exp(-jnp.abs(x)))


def _small_k_matmul(x, w_ref):
    """x @ w for tiny K (2..3) as VPU broadcast-FMAs instead of an MXU matmul."""
    k_dim = w_ref.shape[0]
    acc = x[:, 0:1] * w_ref[0:1, :]
    for k in range(1, k_dim):
        acc = acc + x[:, k : k + 1] * w_ref[k : k + 1, :]
    return acc


def _vae_kernel(x_ref, eps_ref,
                e_w1_ref, e_b1_ref, e_w2_ref, e_b2_ref,    # encoder
                head_w_ref, head_b_ref,                    # fused latent heads (padded to 128 lanes)
                d_w1_ref, d_b1_ref, d_w2_ref, d_b2_ref,    # decoder
                o_w_ref, o_b_ref,                          # output mean layer (padded to 128 lanes)
                out_ref,
                *, input_dim, latent_dim):
    f32, bf16 = jnp.float32, jnp.bfloat16

    x = x_ref[...]          # (TB, D_in) f32
    eps = eps_ref[...]      # (TB, L)    f32

    # --- encoder layer 1: Linear(D_in, F) + Softplus, K<=3 -> VPU FMAs ---
    h = _softplus(_small_k_matmul(x, e_w1_ref) + e_b1_ref[...])                 # (TB, F)

    # --- encoder layer 2: Linear(F, S) + Softplus, K=200 -> MXU (bf16 in, f32 acc) ---
    h = _softplus(jnp.dot(h.astype(bf16), e_w2_ref[...],
                          preferred_element_type=f32) + e_b2_ref[...])          # (TB, S)

    # --- fused latent heads, one full-lane dot: cols D:D+L = mean, D+L:D+2L = logvar ---
    head = jnp.dot(h.astype(bf16), head_w_ref[...],
                   preferred_element_type=f32) + head_b_ref[...]                # (TB, 128)
    lo = input_dim
    lmean = head[:, lo : lo + latent_dim]                                       # (TB, L)
    logvar = head[:, lo + latent_dim : lo + 2 * latent_dim]                     # (TB, L)
    scale = jnp.exp(logvar)             # torch code: Normal(loc, scale=logvar.exp())

    # --- reparameterized sample (rsample with external eps), f32 VPU work ---
    z = lmean + scale * eps                                                     # (TB, L)

    # --- decoder layer 1: Linear(L, S) + Softplus, K=2 -> VPU FMAs ---
    d = _softplus(_small_k_matmul(z, d_w1_ref) + d_b1_ref[...])                 # (TB, S)

    # --- decoder layer 2: Linear(S, F) + Softplus, K=100 -> MXU ---
    d = _softplus(jnp.dot(d.astype(bf16), d_w2_ref[...],
                          preferred_element_type=f32) + d_b2_ref[...])          # (TB, F)

    # --- reconstruction mean, produced directly into lanes 0:D of a 128-wide slab ---
    mean_slab = jnp.dot(d.astype(bf16), o_w_ref[...],
                        preferred_element_type=f32) + o_b_ref[...]              # (TB, 128)

    # --- pack [mean | lmean | scale | 0] into one lane-dense f32 output slab ---
    # head is zero outside its columns; mean_slab is zero outside cols 0:D.
    col = jax.lax.broadcasted_iota(jnp.int32, mean_slab.shape, 1)
    is_scale_col = (col >= lo + latent_dim) & (col < lo + 2 * latent_dim)
    out_ref[...] = mean_slab + jnp.where(is_scale_col, jnp.exp(head), head)


@functools.partial(jax.jit, static_argnames=("tile_b",))
def vae_forward(x, eps, params, *, tile_b=128):
    """Returns (reconstruction_mean, latent_mean, latent_scale)."""
    B, input_dim = x.shape
    latent_dim = eps.shape[1]
    f_hidden = params["e_b1"].shape[1]
    s_hidden = params["e_b2"].shape[1]
    assert input_dim + 2 * latent_dim <= OUT_W
    bf16 = jnp.bfloat16

    # --- pack / pad weights (tiny tensors; in a real pipeline pre-pack once) ---
    e_w1, e_b1 = params["e_w1"], params["e_b1"]                 # VPU layer -> keep f32
    e_w2, e_b2 = params["e_w2"].astype(bf16), params["e_b2"]    # MXU layer -> bf16 weights
    d_w1, d_b1 = params["d_w1"], params["d_b1"]                 # VPU layer -> keep f32
    d_w2, d_b2 = params["d_w2"].astype(bf16), params["d_b2"]

    # fused latent heads, placed at their final output-column positions
    head_w = jnp.zeros((s_hidden, OUT_W), jnp.float32)
    head_w = head_w.at[:, input_dim:input_dim + latent_dim].set(params["m_w"])
    head_w = head_w.at[:, input_dim + latent_dim:input_dim + 2 * latent_dim].set(params["v_w"])
    head_w = head_w.astype(bf16)
    head_b = jnp.zeros((1, OUT_W), jnp.float32)
    head_b = head_b.at[:, input_dim:input_dim + latent_dim].set(params["m_b"])
    head_b = head_b.at[:, input_dim + latent_dim:input_dim + 2 * latent_dim].set(params["v_b"])

    # output mean layer, padded to full 128 lanes (cols 0:input_dim)
    o_w = jnp.zeros((f_hidden, OUT_W), jnp.float32).at[:, :input_dim].set(params["o_w"]).astype(bf16)
    o_b = jnp.zeros((1, OUT_W), jnp.float32).at[:, :input_dim].set(params["o_b"])

    # --- pad batch to a multiple of tile_b (padded rows are sliced off below) ---
    nb = pl.cdiv(B, tile_b)
    bp = nb * tile_b
    if bp != B:
        x = jnp.pad(x, ((0, bp - B), (0, 0)))
        eps = jnp.pad(eps, ((0, bp - B), (0, 0)))

    kernel = functools.partial(_vae_kernel, input_dim=input_dim, latent_dim=latent_dim)

    def batch_spec(d):      # batch-tiled arrays: new block each grid step
        return pl.BlockSpec((tile_b, d), lambda i: (i, 0))

    def const_spec(a):      # weights/biases: same block every step -> stay VMEM-resident
        return pl.BlockSpec(a.shape, lambda i: (0, 0))

    args = [x, eps, e_w1, e_b1, e_w2, e_b2, head_w, head_b,
            d_w1, d_b1, d_w2, d_b2, o_w, o_b]
    in_specs = [batch_spec(input_dim), batch_spec(latent_dim)] + \
               [const_spec(a) for a in args[2:]]

    packed = pl.pallas_call(
        kernel,
        out_shape=jax.ShapeDtypeStruct((bp, OUT_W), jnp.float32),
        grid_spec=pltpu.PrefetchScalarGridSpec(
            num_scalar_prefetch=0,
            grid=(nb,),
            in_specs=in_specs,
            out_specs=batch_spec(OUT_W)),
        compiler_params=pltpu.CompilerParams(
            dimension_semantics=("parallel",)),
    )(*args)

    packed = packed[:B]
    mean = packed[:, :input_dim]
    lmean = packed[:, input_dim:input_dim + latent_dim]
    scale = packed[:, input_dim + latent_dim:input_dim + 2 * latent_dim]
    return mean, lmean, scale


def init_params(key, input_dim=3, f_hidden_dim=200, s_hidden_dim=100, latent_dim=2):
    """Deterministic synthetic parameters (same shapes as the torch module)."""
    def linear(k, fan_in, fan_out):
        kw, kb = jax.random.split(k)
        w = jax.random.normal(kw, (fan_in, fan_out), jnp.float32) / jnp.sqrt(jnp.float32(fan_in))
        b = 0.01 * jax.random.normal(kb, (1, fan_out), jnp.float32)
        return w, b

    ks = jax.random.split(key, 7)
    p = {}
    p["e_w1"], p["e_b1"] = linear(ks[0], input_dim, f_hidden_dim)
    p["e_w2"], p["e_b2"] = linear(ks[1], f_hidden_dim, s_hidden_dim)
    p["m_w"], p["m_b"] = linear(ks[2], s_hidden_dim, latent_dim)
    p["v_w"], p["v_b"] = linear(ks[3], s_hidden_dim, latent_dim)
    p["d_w1"], p["d_b1"] = linear(ks[4], latent_dim, s_hidden_dim)
    p["d_w2"], p["d_b2"] = linear(ks[5], s_hidden_dim, f_hidden_dim)
    p["o_w"], p["o_b"] = linear(ks[6], f_hidden_dim, input_dim)
    return p


def vae_forward_ref(x, eps, p, *, mxu_dtype=jnp.float32):
    """Pure-JAX reference.  mxu_dtype=bf16 mirrors the kernel's mixed-precision
    policy (bf16 MXU operands, f32 accumulation) for tight validation."""
    hi = jax.lax.Precision.HIGHEST
    sp = jax.nn.softplus

    def mm(a, w):  # the K>=100 layers (MXU layers in the kernel)
        return jnp.dot(a.astype(mxu_dtype), w.astype(mxu_dtype),
                       preferred_element_type=jnp.float32, precision=hi)

    h = sp(jnp.dot(x, p["e_w1"], precision=hi) + p["e_b1"])     # K=3: exact f32 (VPU in kernel)
    h = sp(mm(h, p["e_w2"]) + p["e_b2"])
    lmean = mm(h, p["m_w"]) + p["m_b"]
    scale = jnp.exp(mm(h, p["v_w"]) + p["v_b"])
    z = lmean + scale * eps
    d = sp(jnp.dot(z, p["d_w1"], precision=hi) + p["d_b1"])     # K=2: exact f32 (VPU in kernel)
    d = sp(mm(d, p["d_w2"]) + p["d_b2"])
    mean = mm(d, p["o_w"]) + p["o_b"]
    return mean, lmean, scale


# TODO(synk): loss_function (KL divergence + Gaussian log-prob) is not part of
# forward(); it is not implemented here.

if __name__ == "__main__":
    key = jax.random.PRNGKey(0)
    kp, kx, ke = jax.random.split(key, 3)

    INPUT_DIM, LATENT_DIM, BATCH, TILE_B = 3, 2, 256, 128
    params = init_params(kp, input_dim=INPUT_DIM, latent_dim=LATENT_DIM)
    x = jax.random.normal(kx, (BATCH, INPUT_DIM), jnp.float32)
    eps = jax.random.normal(ke, (BATCH, LATENT_DIM), jnp.float32)

    mean, lat_mean, lat_scale = vae_forward(x, eps, params, tile_b=TILE_B)
    jax.block_until_ready((mean, lat_mean, lat_scale))

    # Tight check vs. a reference using the same bf16-operand / f32-accumulate policy.
    r_mean, r_lmean, r_scale = vae_forward_ref(x, eps, params, mxu_dtype=jnp.bfloat16)
    assert jnp.allclose(mean, r_mean, atol=2e-3, rtol=2e-3)
    assert jnp.allclose(lat_mean, r_lmean, atol=2e-3, rtol=2e-3)
    assert jnp.allclose(lat_scale, r_scale, atol=2e-3, rtol=2e-3)

    # Loose sanity check vs. the pure-f32 module semantics (differs only by
    # standard mixed-precision rounding) — relative L2 error.
    f_mean, f_lmean, f_scale = vae_forward_ref(x, eps, params, mxu_dtype=jnp.float32)
    rel = lambda a, b: float(jnp.linalg.norm(a - b) / (jnp.linalg.norm(b) + 1e-12))
    assert rel(mean, f_mean) < 0.1
    assert rel(lat_mean, f_lmean) < 0.1
    assert rel(lat_scale, f_scale) < 0.1

    print("KERNEL_OK")
</pallas_src>

<mosaic_0001>
module attributes {stable_mosaic.version = 11 : i64} {
  func.func @_vae_kernel(%arg0: i32, %arg1: memref<128x3xf32, #tpu.memory_space<vmem>>, %arg2: memref<128x2xf32, #tpu.memory_space<vmem>>, %arg3: memref<3x200xf32, #tpu.memory_space<vmem>>, %arg4: memref<1x200xf32, #tpu.memory_space<vmem>>, %arg5: memref<200x100xbf16, #tpu.memory_space<vmem>>, %arg6: memref<1x100xf32, #tpu.memory_space<vmem>>, %arg7: memref<100x128xbf16, #tpu.memory_space<vmem>>, %arg8: memref<1x128xf32, #tpu.memory_space<vmem>>, %arg9: memref<2x100xf32, #tpu.memory_space<vmem>>, %arg10: memref<1x100xf32, #tpu.memory_space<vmem>>, %arg11: memref<100x200xbf16, #tpu.memory_space<vmem>>, %arg12: memref<1x200xf32, #tpu.memory_space<vmem>>, %arg13: memref<200x128xbf16, #tpu.memory_space<vmem>>, %arg14: memref<1x128xf32, #tpu.memory_space<vmem>>, %arg15: memref<128x128xf32, #tpu.memory_space<vmem>>) attributes {dimension_semantics = [#tpu.dimension_semantics<parallel>], iteration_bounds = array<i64: 2>, scalar_prefetch = 0 : i64, scratch_operands = 0 : i64, tpu.core_type = #tpu.core_type<tc>, window_params = [{transform_indices = @transform_0, window_bounds = array<i64: 128, 3>}, {transform_indices = @transform_1, window_bounds = array<i64: 128, 2>}, {pipeline_mode = #tpu.pipeline_mode<synchronous>, transform_indices = @transform_2, window_bounds = array<i64: 3, 200>}, {pipeline_mode = #tpu.pipeline_mode<synchronous>, transform_indices = @transform_3, window_bounds = array<i64: 1, 200>}, {pipeline_mode = #tpu.pipeline_mode<synchronous>, transform_indices = @transform_4, window_bounds = array<i64: 200, 100>}, {pipeline_mode = #tpu.pipeline_mode<synchronous>, transform_indices = @transform_5, window_bounds = array<i64: 1, 100>}, {pipeline_mode = #tpu.pipeline_mode<synchronous>, transform_indices = @transform_6, window_bounds = array<i64: 100, 128>}, {pipeline_mode = #tpu.pipeline_mode<synchronous>, transform_indices = @transform_7, window_bounds = array<i64: 1, 128>}, {pipeline_mode = #tpu.pipeline_mode<synchronous>, transform_indices = @transform_8, window_bounds = array<i64: 2, 100>}, {pipeline_mode = #tpu.pipeline_mode<synchronous>, transform_indices = @transform_9, window_bounds = array<i64: 1, 100>}, {pipeline_mode = #tpu.pipeline_mode<synchronous>, transform_indices = @transform_10, window_bounds = array<i64: 100, 200>}, {pipeline_mode = #tpu.pipeline_mode<synchronous>, transform_indices = @transform_11, window_bounds = array<i64: 1, 200>}, {pipeline_mode = #tpu.pipeline_mode<synchronous>, transform_indices = @transform_12, window_bounds = array<i64: 200, 128>}, {pipeline_mode = #tpu.pipeline_mode<synchronous>, transform_indices = @transform_13, window_bounds = array<i64: 1, 128>}, {transform_indices = @transform_14, window_bounds = array<i64: 128, 128>}]} {
    %c0 = arith.constant 0 : index
    %c0_0 = arith.constant 0 : index
    %0 = vector.load %arg1[%c0, %c0_0] : memref<128x3xf32, #tpu.memory_space<vmem>>, vector<128x3xf32>
    %c0_1 = arith.constant 0 : index
    %c0_2 = arith.constant 0 : index
    %1 = vector.load %arg2[%c0_1, %c0_2] : memref<128x2xf32, #tpu.memory_space<vmem>>, vector<128x2xf32>
    %2 = vector.extract_strided_slice %0 {offsets = [0, 0], sizes = [128, 1], strides = [1, 1]} : vector<128x3xf32> to vector<128x1xf32>
    %c0_3 = arith.constant 0 : index
    %c0_4 = arith.constant 0 : index
    %3 = vector.load %arg3[%c0_3, %c0_4] : memref<3x200xf32, #tpu.memory_space<vmem>>, vector<1x200xf32>
    %4 = vector.broadcast %2 : vector<128x1xf32> to vector<128x200xf32>
    %5 = vector.broadcast %3 : vector<1x200xf32> to vector<128x200xf32>
    %6 = arith.mulf %4, %5 : vector<128x200xf32>
    %7 = vector.extract_strided_slice %0 {offsets = [0, 1], sizes = [128, 1], strides = [1, 1]} : vector<128x3xf32> to vector<128x1xf32>
    %c1 = arith.constant 1 : index
    %c0_5 = arith.constant 0 : index
    %8 = vector.load %arg3[%c1, %c0_5] : memref<3x200xf32, #tpu.memory_space<vmem>>, vector<1x200xf32>
    %9 = vector.broadcast %7 : vector<128x1xf32> to vector<128x200xf32>
    %10 = vector.broadcast %8 : vector<1x200xf32> to vector<128x200xf32>
    %11 = arith.mulf %9, %10 : vector<128x200xf32>
    %12 = arith.addf %6, %11 : vector<128x200xf32>
    %13 = vector.extract_strided_slice %0 {offsets = [0, 2], sizes = [128, 1], strides = [1, 1]} : vector<128x3xf32> to vector<128x1xf32>
    %c2 = arith.constant 2 : index
    %c0_6 = arith.constant 0 : index
    %14 = vector.load %arg3[%c2, %c0_6] : memref<3x200xf32, #tpu.memory_space<vmem>>, vector<1x200xf32>
    %15 = vector.broadcast %13 : vector<128x1xf32> to vector<128x200xf32>
    %16 = vector.broadcast %14 : vector<1x200xf32> to vector<128x200xf32>
    %17 = arith.mulf %15, %16 : vector<128x200xf32>
    %18 = arith.addf %12, %17 : vector<128x200xf32>
    %c0_7 = arith.constant 0 : index
    %c0_8 = arith.constant 0 : index
    %19 = vector.load %arg4[%c0_7, %c0_8] : memref<1x200xf32, #tpu.memory_space<vmem>>, vector<1x200xf32>
    %20 = vector.broadcast %19 : vector<1x200xf32> to vector<128x200xf32>
    %21 = arith.addf %18, %20 : vector<128x200xf32>
    %cst = arith.constant 0.000000e+00 : f32
    %22 = vector.broadcast %cst : f32 to vector<128x200xf32>
    %23 = arith.maximumf %21, %22 : vector<128x200xf32>
    %24 = math.absf %21 : vector<128x200xf32>
    %cst_9 = arith.constant 0.000000e+00 : f32
    %25 = vector.broadcast %cst_9 : f32 to vector<128x200xf32>
    %26 = arith.subf %25, %24 : vector<128x200xf32>
    %27 = math.exp %26 : vector<128x200xf32>
    %cst_10 = arith.constant 1.000000e+00 : f32
    %28 = vector.broadcast %cst_10 : f32 to vector<128x200xf32>
    %29 = arith.addf %28, %27 : vector<128x200xf32>
    %30 = math.log %29 : vector<128x200xf32>
    %31 = arith.addf %23, %30 : vector<128x200xf32>
    %32 = arith.truncf %31 : vector<128x200xf32> to vector<128x200xbf16>
    %c0_11 = arith.constant 0 : index
    %c0_12 = arith.constant 0 : index
    %33 = vector.load %arg5[%c0_11, %c0_12] : memref<200x100xbf16, #tpu.memory_space<vmem>>, vector<200x100xbf16>
    %cst_13 = arith.constant dense<0.000000e+00> : vector<128x100xf32>
    %34 = tpu.matmul %32, %33, %cst_13 {dimension_numbers = #tpu.dot_dimension_numbers<[1], [0], [0], [1], [0, 0, 1, 1], [], []>} : vector<128x200xbf16>, vector<200x100xbf16>, vector<128x100xf32> -> vector<128x100xf32>
    %c0_14 = arith.constant 0 : index
    %c0_15 = arith.constant 0 : index
    %35 = vector.load %arg6[%c0_14, %c0_15] : memref<1x100xf32, #tpu.memory_space<vmem>>, vector<1x100xf32>
    %36 = vector.broadcast %35 : vector<1x100xf32> to vector<128x100xf32>
    %37 = arith.addf %34, %36 : vector<128x100xf32>
    %cst_16 = arith.constant 0.000000e+00 : f32
    %38 = vector.broadcast %cst_16 : f32 to vector<128x100xf32>
    %39 = arith.maximumf %37, %38 : vector<128x100xf32>
    %40 = math.absf %37 : vector<128x100xf32>
    %cst_17 = arith.constant 0.000000e+00 : f32
    %41 = vector.broadcast %cst_17 : f32 to vector<128x100xf32>
    %42 = arith.subf %41, %40 : vector<128x100xf32>
    %43 = math.exp %42 : vector<128x100xf32>
    %cst_18 = arith.constant 1.000000e+00 : f32
    %44 = vector.broadcast %cst_18 : f32 to vector<128x100xf32>
    %45 = arith.addf %44, %43 : vector<128x100xf32>
    %46 = math.log %45 : vector<128x100xf32>
    %47 = arith.addf %39, %46 : vector<128x100xf32>
    %48 = arith.truncf %47 : vector<128x100xf32> to vector<128x100xbf16>
    %c0_19 = arith.constant 0 : index
    %c0_20 = arith.constant 0 : index
    %49 = vector.load %arg7[%c0_19, %c0_20] : memref<100x128xbf16, #tpu.memory_space<vmem>>, vector<100x128xbf16>
    %cst_21 = arith.constant dense<0.000000e+00> : vector<128x128xf32>
    %50 = tpu.matmul %48, %49, %cst_21 {dimension_numbers = #tpu.dot_dimension_numbers<[1], [0], [0], [1], [0, 0, 1, 1], [], []>} : vector<128x100xbf16>, vector<100x128xbf16>, vector<128x128xf32> -> vector<128x128xf32>
    %c0_22 = arith.constant 0 : index
    %c0_23 = arith.constant 0 : index
    %51 = vector.load %arg8[%c0_22, %c0_23] : memref<1x128xf32, #tpu.memory_space<vmem>>, vector<1x128xf32>
    %52 = vector.broadcast %51 : vector<1x128xf32> to vector<128x128xf32>
    %53 = arith.addf %50, %52 : vector<128x128xf32>
    %54 = vector.extract_strided_slice %53 {offsets = [0, 3], sizes = [128, 2], strides = [1, 1]} : vector<128x128xf32> to vector<128x2xf32>
    %55 = vector.extract_strided_slice %53 {offsets = [0, 5], sizes = [128, 2], strides = [1, 1]} : vector<128x128xf32> to vector<128x2xf32>
    %56 = math.exp %55 : vector<128x2xf32>
    %57 = arith.mulf %56, %1 : vector<128x2xf32>
    %58 = arith.addf %54, %57 : vector<128x2xf32>
    %59 = vector.extract_strided_slice %58 {offsets = [0, 0], sizes = [128, 1], strides = [1, 1]} : vector<128x2xf32> to vector<128x1xf32>
    %c0_24 = arith.constant 0 : index
    %c0_25 = arith.constant 0 : index
    %60 = vector.load %arg9[%c0_24, %c0_25] : memref<2x100xf32, #tpu.memory_space<vmem>>, vector<1x100xf32>
    %61 = vector.broadcast %59 : vector<128x1xf32> to vector<128x100xf32>
    %62 = vector.broadcast %60 : vector<1x100xf32> to vector<128x100xf32>
    %63 = arith.mulf %61, %62 : vector<128x100xf32>
    %64 = vector.extract_strided_slice %58 {offsets = [0, 1], sizes = [128, 1], strides = [1, 1]} : vector<128x2xf32> to vector<128x1xf32>
    %c1_26 = arith.constant 1 : index
    %c0_27 = arith.constant 0 : index
    %65 = vector.load %arg9[%c1_26, %c0_27] : memref<2x100xf32, #tpu.memory_space<vmem>>, vector<1x100xf32>
    %66 = vector.broadcast %64 : vector<128x1xf32> to vector<128x100xf32>
    %67 = vector.broadcast %65 : vector<1x100xf32> to vector<128x100xf32>
    %68 = arith.mulf %66, %67 : vector<128x100xf32>
    %69 = arith.addf %63, %68 : vector<128x100xf32>
    %c0_28 = arith.constant 0 : index
    %c0_29 = arith.constant 0 : index
    %70 = vector.load %arg10[%c0_28, %c0_29] : memref<1x100xf32, #tpu.memory_space<vmem>>, vector<1x100xf32>
    %71 = vector.broadcast %70 : vector<1x100xf32> to vector<128x100xf32>
    %72 = arith.addf %69, %71 : vector<128x100xf32>
    %cst_30 = arith.constant 0.000000e+00 : f32
    %73 = vector.broadcast %cst_30 : f32 to vector<128x100xf32>
    %74 = arith.maximumf %72, %73 : vector<128x100xf32>
    %75 = math.absf %72 : vector<128x100xf32>
    %cst_31 = arith.constant 0.000000e+00 : f32
    %76 = vector.broadcast %cst_31 : f32 to vector<128x100xf32>
    %77 = arith.subf %76, %75 : vector<128x100xf32>
    %78 = math.exp %77 : vector<128x100xf32>
    %cst_32 = arith.constant 1.000000e+00 : f32
    %79 = vector.broadcast %cst_32 : f32 to vector<128x100xf32>
    %80 = arith.addf %79, %78 : vector<128x100xf32>
    %81 = math.log %80 : vector<128x100xf32>
    %82 = arith.addf %74, %81 : vector<128x100xf32>
    %83 = arith.truncf %82 : vector<128x100xf32> to vector<128x100xbf16>
    %c0_33 = arith.constant 0 : index
    %c0_34 = arith.constant 0 : index
    %84 = vector.load %arg11[%c0_33, %c0_34] : memref<100x200xbf16, #tpu.memory_space<vmem>>, vector<100x200xbf16>
    %cst_35 = arith.constant dense<0.000000e+00> : vector<128x200xf32>
    %85 = tpu.matmul %83, %84, %cst_35 {dimension_numbers = #tpu.dot_dimension_numbers<[1], [0], [0], [1], [0, 0, 1, 1], [], []>} : vector<128x100xbf16>, vector<100x200xbf16>, vector<128x200xf32> -> vector<128x200xf32>
    %c0_36 = arith.constant 0 : index
    %c0_37 = arith.constant 0 : index
    %86 = vector.load %arg12[%c0_36, %c0_37] : memref<1x200xf32, #tpu.memory_space<vmem>>, vector<1x200xf32>
    %87 = vector.broadcast %86 : vector<1x200xf32> to vector<128x200xf32>
    %88 = arith.addf %85, %87 : vector<128x200xf32>
    %cst_38 = arith.constant 0.000000e+00 : f32
    %89 = vector.broadcast %cst_38 : f32 to vector<128x200xf32>
    %90 = arith.maximumf %88, %89 : vector<128x200xf32>
    %91 = math.absf %88 : vector<128x200xf32>
    %cst_39 = arith.constant 0.000000e+00 : f32
    %92 = vector.broadcast %cst_39 : f32 to vector<128x200xf32>
    %93 = arith.subf %92, %91 : vector<128x200xf32>
    %94 = math.exp %93 : vector<128x200xf32>
    %cst_40 = arith.constant 1.000000e+00 : f32
    %95 = vector.broadcast %cst_40 : f32 to vector<128x200xf32>
    %96 = arith.addf %95, %94 : vector<128x200xf32>
    %97 = math.log %96 : vector<128x200xf32>
    %98 = arith.addf %90, %97 : vector<128x200xf32>
    %99 = arith.truncf %98 : vector<128x200xf32> to vector<128x200xbf16>
    %c0_41 = arith.constant 0 : index
    %c0_42 = arith.constant 0 : index
    %100 = vector.load %arg13[%c0_41, %c0_42] : memref<200x128xbf16, #tpu.memory_space<vmem>>, vector<200x128xbf16>
    %cst_43 = arith.constant dense<0.000000e+00> : vector<128x128xf32>
    %101 = tpu.matmul %99, %100, %cst_43 {dimension_numbers = #tpu.dot_dimension_numbers<[1], [0], [0], [1], [0, 0, 1, 1], [], []>} : vector<128x200xbf16>, vector<200x128xbf16>, vector<128x128xf32> -> vector<128x128xf32>
    %c0_44 = arith.constant 0 : index
    %c0_45 = arith.constant 0 : index
    %102 = vector.load %arg14[%c0_44, %c0_45] : memref<1x128xf32, #tpu.memory_space<vmem>>, vector<1x128xf32>
    %103 = vector.broadcast %102 : vector<1x128xf32> to vector<128x128xf32>
    %104 = arith.addf %101, %103 : vector<128x128xf32>
    %105 = tpu.iota {dimensions = array<i32: 1>} : vector<128x128xi32>
    %c5_i32 = arith.constant 5 : i32
    %106 = vector.broadcast %c5_i32 : i32 to vector<128x128xi32>
    %107 = arith.cmpi sge, %105, %106 : vector<128x128xi32>
    %c7_i32 = arith.constant 7 : i32
    %108 = vector.broadcast %c7_i32 : i32 to vector<128x128xi32>
    %109 = arith.cmpi slt, %105, %108 : vector<128x128xi32>
    %110 = arith.andi %107, %109 : vector<128x128xi1>
    %111 = math.exp %53 : vector<128x128xf32>
    %112 = arith.select %110, %111, %53 : vector<128x128xi1>, vector<128x128xf32>
    %113 = arith.addf %104, %112 : vector<128x128xf32>
    %c0_46 = arith.constant 0 : index
    %c0_47 = arith.constant 0 : index
    %114 = vector.load %arg15[%c0_46, %c0_47] : memref<128x128xf32, #tpu.memory_space<vmem>>, vector<128x128xf32>
    tpu.vector_store %arg15[%c0_46, %c0_47], %113 {strides = array<i32>} : memref<128x128xf32, #tpu.memory_space<vmem>>, vector<128x128xf32>,
    return
  }
  func.func @transform_0(%arg0: i32) -> (i32, i32) {
    %c0_i32 = arith.constant 0 : i32
    %c0_i32_0 = arith.constant 0 : i32
    return %arg0, %c0_i32 : i32, i32
  }
  func.func @transform_1(%arg0: i32) -> (i32, i32) {
    %c0_i32 = arith.constant 0 : i32
    %c0_i32_0 = arith.constant 0 : i32
    return %arg0, %c0_i32 : i32, i32
  }
  func.func @transform_2(%arg0: i32) -> (i32, i32) {
    %c0_i32 = arith.constant 0 : i32
    %c0_i32_0 = arith.constant 0 : i32
    %c0_i32_1 = arith.constant 0 : i32
    return %c0_i32, %c0_i32_0 : i32, i32
  }
  func.func @transform_3(%arg0: i32) -> (i32, i32) {
    %c0_i32 = arith.constant 0 : i32
    %c0_i32_0 = arith.constant 0 : i32
    %c0_i32_1 = arith.constant 0 : i32
    return %c0_i32, %c0_i32_0 : i32, i32
  }
  func.func @transform_4(%arg0: i32) -> (i32, i32) {
    %c0_i32 = arith.constant 0 : i32
    %c0_i32_0 = arith.constant 0 : i32
    %c0_i32_1 = arith.constant 0 : i32
    return %c0_i32, %c0_i32_0 : i32, i32
  }
  func.func @transform_5(%arg0: i32) -> (i32, i32) {
    %c0_i32 = arith.constant 0 : i32
    %c0_i32_0 = arith.constant 0 : i32
    %c0_i32_1 = arith.constant 0 : i32
    return %c0_i32, %c0_i32_0 : i32, i32
  }
  func.func @transform_6(%arg0: i32) -> (i32, i32) {
    %c0_i32 = arith.constant 0 : i32
    %c0_i32_0 = arith.constant 0 : i32
    %c0_i32_1 = arith.constant 0 : i32
    return %c0_i32, %c0_i32_0 : i32, i32
  }
  func.func @transform_7(%arg0: i32) -> (i32, i32) {
    %c0_i32 = arith.constant 0 : i32
    %c0_i32_0 = arith.constant 0 : i32
    %c0_i32_1 = arith.constant 0 : i32
    return %c0_i32, %c0_i32_0 : i32, i32
  }
  func.func @transform_8(%arg0: i32) -> (i32, i32) {
    %c0_i32 = arith.constant 0 : i32
    %c0_i32_0 = arith.constant 0 : i32
    %c0_i32_1 = arith.constant 0 : i32
    return %c0_i32, %c0_i32_0 : i32, i32
  }
  func.func @transform_9(%arg0: i32) -> (i32, i32) {
    %c0_i32 = arith.constant 0 : i32
    %c0_i32_0 = arith.constant 0 : i32
    %c0_i32_1 = arith.constant 0 : i32
    return %c0_i32, %c0_i32_0 : i32, i32
  }
  func.func @transform_10(%arg0: i32) -> (i32, i32) {
    %c0_i32 = arith.constant 0 : i32
    %c0_i32_0 = arith.constant 0 : i32
    %c0_i32_1 = arith.constant 0 : i32
    return %c0_i32, %c0_i32_0 : i32, i32
  }
  func.func @transform_11(%arg0: i32) -> (i32, i32) {
    %c0_i32 = arith.constant 0 : i32
    %c0_i32_0 = arith.constant 0 : i32
    %c0_i32_1 = arith.constant 0 : i32
    return %c0_i32, %c0_i32_0 : i32, i32
  }
  func.func @transform_12(%arg0: i32) -> (i32, i32) {
    %c0_i32 = arith.constant 0 : i32
    %c0_i32_0 = arith.constant 0 : i32
    %c0_i32_1 = arith.constant 0 : i32
    return %c0_i32, %c0_i32_0 : i32, i32
  }
  func.func @transform_13(%arg0: i32) -> (i32, i32) {
    %c0_i32 = arith.constant 0 : i32
    %c0_i32_0 = arith.constant 0 : i32
    %c0_i32_1 = arith.constant 0 : i32
    return %c0_i32, %c0_i32_0 : i32, i32
  }
  func.func @transform_14(%arg0: i32) -> (i32, i32) {
    %c0_i32 = arith.constant 0 : i32
    %c0_i32_0 = arith.constant 0 : i32
    return %arg0, %c0_i32 : i32, i32
  }
}

</mosaic_0001>

<llo_original>
// kernel: vae_forward.1
$region0: #{vae_forward.1}
  #allocation0 [shape = 'u32[]', space=smem, size = 0x4, offset = 0x4, fixed_abs, tag = 'smem constant byte address 0x4 - core index']
  #allocation1 [shape = 'u32[72,128]{1,0:T(1,128)}', space=vmem, size = 0x9000, scoped, tag = 'internal scratch']
  %s0 = inlined_call_operand.vmem [shape: f32[256,3], index: 0, kind: input, shape index: {}]
  %s1 = inlined_call_operand.vmem [shape: f32[256,2], index: 1, kind: input, shape index: {}]
  %s2 = inlined_call_operand.vmem [shape: f32[3,200], index: 2, kind: input, shape index: {}]
  %s3 = inlined_call_operand.vmem [shape: f32[1,200], index: 3, kind: input, shape index: {}]
  %s4 = inlined_call_operand.vmem [shape: bf16[200,100], index: 4, kind: input, shape index: {}]
  %s5 = inlined_call_operand.vmem [shape: f32[1,100], index: 5, kind: input, shape index: {}]
  %s6 = inlined_call_operand.vmem [shape: bf16[100,128], index: 6, kind: input, shape index: {}]
  %s7 = inlined_call_operand.vmem [shape: f32[1,128], index: 7, kind: input, shape index: {}]
  %s8 = inlined_call_operand.vmem [shape: f32[2,100], index: 8, kind: input, shape index: {}]
  %s9 = inlined_call_operand.vmem [shape: f32[1,100], index: 9, kind: input, shape index: {}]
  %s10 = inlined_call_operand.vmem [shape: bf16[100,200], index: 10, kind: input, shape index: {}]
  %s11 = inlined_call_operand.vmem [shape: f32[1,200], index: 11, kind: input, shape index: {}]
  %s12 = inlined_call_operand.vmem [shape: bf16[200,128], index: 12, kind: input, shape index: {}]
  %s13 = inlined_call_operand.vmem [shape: f32[1,128], index: 13, kind: input, shape index: {}]
  %s14 = inlined_call_operand.vmem [shape: f32[256,128], index: 14, kind: output, shape index: {}]
  %s15 = sld [smem:[#allocation0]]
  $region89: #{vae_forward.1} parent=0
    _
  %s17 = ssub.s32 1, %s15
  %s18 = scalar_select 0, %s17, %s15
  loop: start=0, step=1, limit=4
  $region2: #{vae_forward.1} parent=0 // loop_pre_header
    _
  $region3: #{vae_forward.1} parent=0 // loop_header
    %s20 = sphi 0, %s24
    %p21 = scmp.ge.s32.totalorder %s20, 4
    %s30 = sphi 0, %s32
    %s33 = sphi 0, %s30
    %s34 = sphi 0, %s33
    %s50 = sphi 0, %s34
    %s56 = sphi 0, %s58
    %s59 = sphi 0, %s56
    %s60 = sphi 0, %s59
    %s76 = sphi 0, %s60
    %s80 = sphi 0, %s80
    %s82 = sphi 0, %s80
    %s83 = sphi 0, %s82
    %s97 = sphi 0, %s83
    %s101 = sphi 0, %s101
    %s103 = sphi 0, %s101
    %s104 = sphi 0, %s103
    %s118 = sphi 0, %s104
    %s122 = sphi 0, %s122
    %s124 = sphi 0, %s122
    %s125 = sphi 0, %s124
    %s139 = sphi 0, %s125
    %s143 = sphi 0, %s143
    %s145 = sphi 0, %s143
    %s146 = sphi 0, %s145
    %s160 = sphi 0, %s146
    %s164 = sphi 0, %s164
    %s166 = sphi 0, %s164
    %s167 = sphi 0, %s166
    %s181 = sphi 0, %s167
    %s185 = sphi 0, %s185
    %s187 = sphi 0, %s185
    %s188 = sphi 0, %s187
    %s202 = sphi 0, %s188
    %s206 = sphi 0, %s206
    %s208 = sphi 0, %s206
    %s209 = sphi 0, %s208
    %s223 = sphi 0, %s209
    %s227 = sphi 0, %s227
    %s229 = sphi 0, %s227
    %s230 = sphi 0, %s229
    %s244 = sphi 0, %s230
    %s248 = sphi 0, %s248
    %s250 = sphi 0, %s248
    %s251 = sphi 0, %s250
    %s265 = sphi 0, %s251
    %s269 = sphi 0, %s269
    %s271 = sphi 0, %s269
    %s272 = sphi 0, %s271
    %s286 = sphi 0, %s272
    %s290 = sphi 0, %s290
    %s292 = sphi 0, %s290
    %s293 = sphi 0, %s292
    %s307 = sphi 0, %s293
    %s311 = sphi 0, %s311
    %s313 = sphi 0, %s311
    %s314 = sphi 0, %s313
    %s328 = sphi 0, %s314
    %s334 = sphi 0, %s336
    %s337 = sphi 0, %s334
    %s338 = sphi 0, %s337
    %s354 = sphi 0, %s338
  $region4: #{vae_forward.1} parent=0 // loop_header_branch
    %23 = sbr.rel (%p21) target = $region8
  $region5: #{vae_forward.1} parent=0 // loop_body
    %s25 = ssub.s32 %s20, 1
    %s26 = ssub.s32 %s20, 2
    %s27 = sadd.s32 %s20, 1
    %s28 = ssub.s32 %s20, %s27
    %p29 = scmp.eq.s32.totalorder %s28, 0
    %s31 = sadd.s32 %s30, 1
    %s32 = scalar_select %p29, %s30, %s31
    %p35 = pneg %p29
    %p36 = scmp.eq.s32.totalorder %s20, 1
    %p37 = por %p35, %p36
    %p38 = scmp.ne.s32.totalorder %s30, %s33
    %p39 = scmp.eq.s32.totalorder %s20, 0
    %p40 = por %p38, %p39
    %p41 = scmp.ne.s32.totalorder %s30, %s33
    %p42 = scmp.eq.s32.totalorder %s25, 1
    %p43 = por %p41, %p42
    %p44 = scmp.ne.s32.totalorder %s33, %s34
    %p45 = scmp.eq.s32.totalorder %s25, 0
    %p46 = por %p44, %p45
    %p47 = scmp.ne.s32.totalorder %s33, %s34
    %p48 = scmp.eq.s32.totalorder %s26, 1
    %p49 = por %p47, %p48
    %p51 = scmp.ne.s32.totalorder %s34, %s50
    %p52 = scmp.eq.s32.totalorder %s26, 0
    %p53 = por %p51, %p52
    %s54 = ssub.s32 %s20, %s27
    %p55 = scmp.eq.s32.totalorder %s54, 0
    %s57 = sadd.s32 %s56, 1
    %s58 = scalar_select %p55, %s56, %s57
    %p61 = pneg %p55
    %p62 = scmp.eq.s32.totalorder %s20, 1
    %p63 = por %p61, %p62
    %p64 = scmp.ne.s32.totalorder %s56, %s59
    %p65 = scmp.eq.s32.totalorder %s20, 0
    %p66 = por %p64, %p65
    %p67 = scmp.ne.s32.totalorder %s56, %s59
    %p68 = scmp.eq.s32.totalorder %s25, 1
    %p69 = por %p67, %p68
    %p70 = scmp.ne.s32.totalorder %s59, %s60
    %p71 = scmp.eq.s32.totalorder %s25, 0
    %p72 = por %p70, %p71
    %p73 = scmp.ne.s32.totalorder %s59, %s60
    %p74 = scmp.eq.s32.totalorder %s26, 1
    %p75 = por %p73, %p74
    %p77 = scmp.ne.s32.totalorder %s60, %s76
    %p78 = scmp.eq.s32.totalorder %s26, 0
    %p79 = por %p77, %p78
    %s81 = sadd.s32 %s80, 1
    %p84 = scmp.eq.s32.totalorder %s20, 1
    %p85 = scmp.ne.s32.totalorder %s80, %s82
    %p86 = scmp.eq.s32.totalorder %s20, 0
    %p87 = por %p85, %p86
    %p88 = scmp.ne.s32.totalorder %s80, %s82
    %p89 = scmp.eq.s32.totalorder %s25, 1
    %p90 = por %p88, %p89
    %p91 = scmp.ne.s32.totalorder %s82, %s83
    %p92 = scmp.eq.s32.totalorder %s25, 0
    %p93 = por %p91, %p92
    %p94 = scmp.ne.s32.totalorder %s82, %s83
    %p95 = scmp.eq.s32.totalorder %s26, 1
    %p96 = por %p94, %p95
    %p98 = scmp.ne.s32.totalorder %s83, %s97
    %p99 = scmp.eq.s32.totalorder %s26, 0
    %p100 = por %p98, %p99
    %s102 = sadd.s32 %s101, 1
    %p105 = scmp.eq.s32.totalorder %s20, 1
    %p106 = scmp.ne.s32.totalorder %s101, %s103
    %p107 = scmp.eq.s32.totalorder %s20, 0
    %p108 = por %p106, %p107
    %p109 = scmp.ne.s32.totalorder %s101, %s103
    %p110 = scmp.eq.s32.totalorder %s25, 1
    %p111 = por %p109, %p110
    %p112 = scmp.ne.s32.totalorder %s103, %s104
    %p113 = scmp.eq.s32.totalorder %s25, 0
    %p114 = por %p112, %p113
    %p115 = scmp.ne.s32.totalorder %s103, %s104
    %p116 = scmp.eq.s32.totalorder %s26, 1
    %p117 = por %p115, %p116
    %p119 = scmp.ne.s32.totalorder %s104, %s118
    %p120 = scmp.eq.s32.totalorder %s26, 0
    %p121 = por %p119, %p120
    %s123 = sadd.s32 %s122, 1
    %p126 = scmp.eq.s32.totalorder %s20, 1
    %p127 = scmp.ne.s32.totalorder %s122, %s124
    %p128 = scmp.eq.s32.totalorder %s20, 0
    %p129 = por %p127, %p128
    %p130 = scmp.ne.s32.totalorder %s122, %s124
    %p131 = scmp.eq.s32.totalorder %s25, 1
    %p132 = por %p130, %p131
    %p133 = scmp.ne.s32.totalorder %s124, %s125
    %p134 = scmp.eq.s32.totalorder %s25, 0
    %p135 = por %p133, %p134
    %p136 = scmp.ne.s32.totalorder %s124, %s125
    %p137 = scmp.eq.s32.totalorder %s26, 1
    %p138 = por %p136, %p137
    %p140 = scmp.ne.s32.totalorder %s125, %s139
    %p141 = scmp.eq.s32.totalorder %s26, 0
    %p142 = por %p140, %p141
    %s144 = sadd.s32 %s143, 1
    %p147 = scmp.eq.s32.totalorder %s20, 1
    %p148 = scmp.ne.s32.totalorder %s143, %s145
    %p149 = scmp.eq.s32.totalorder %s20, 0
    %p150 = por %p148, %p149
    %p151 = scmp.ne.s32.totalorder %s143, %s145
    %p152 = scmp.eq.s32.totalorder %s25, 1
    %p153 = por %p151, %p152
    %p154 = scmp.ne.s32.totalorder %s145, %s146
    %p155 = scmp.eq.s32.totalorder %s25, 0
    %p156 = por %p154, %p155
    %p157 = scmp.ne.s32.totalorder %s145, %s146
    %p158 = scmp.eq.s32.totalorder %s26, 1
    %p159 = por %p157, %p158
    %p161 = scmp.ne.s32.totalorder %s146, %s160
    %p162 = scmp.eq.s32.totalorder %s26, 0
    %p163 = por %p161, %p162
    %s165 = sadd.s32 %s164, 1
    %p168 = scmp.eq.s32.totalorder %s20, 1
    %p169 = scmp.ne.s32.totalorder %s164, %s166
    %p170 = scmp.eq.s32.totalorder %s20, 0
    %p171 = por %p169, %p170
    %p172 = scmp.ne.s32.totalorder %s164, %s166
    %p173 = scmp.eq.s32.totalorder %s25, 1
    %p174 = por %p172, %p173
    %p175 = scmp.ne.s32.totalorder %s166, %s167
    %p176 = scmp.eq.s32.totalorder %s25, 0
    %p177 = por %p175, %p176
    %p178 = scmp.ne.s32.totalorder %s166, %s167
    %p179 = scmp.eq.s32.totalorder %s26, 1
    %p180 = por %p178, %p179
    %p182 = scmp.ne.s32.totalorder %s167, %s181
    %p183 = scmp.eq.s32.totalorder %s26, 0
    %p184 = por %p182, %p183
    %s186 = sadd.s32 %s185, 1
    %p189 = scmp.eq.s32.totalorder %s20, 1
    %p190 = scmp.ne.s32.totalorder %s185, %s187
    %p191 = scmp.eq.s32.totalorder %s20, 0
    %p192 = por %p190, %p191
    %p193 = scmp.ne.s32.totalorder %s185, %s187
    %p194 = scmp.eq.s32.totalorder %s25, 1
    %p195 = por %p193, %p194
    %p196 = scmp.ne.s32.totalorder %s187, %s188
    %p197 = scmp.eq.s32.totalorder %s25, 0
    %p198 = por %p196, %p197
    %p199 = scmp.ne.s32.totalorder %s187, %s188
    %p200 = scmp.eq.s32.totalorder %s26, 1
    %p201 = por %p199, %p200
    %p203 = scmp.ne.s32.totalorder %s188, %s202
    %p204 = scmp.eq.s32.totalorder %s26, 0
    %p205 = por %p203, %p204
    %s207 = sadd.s32 %s206, 1
    %p210 = scmp.eq.s32.totalorder %s20, 1
    %p211 = scmp.ne.s32.totalorder %s206, %s208
    %p212 = scmp.eq.s32.totalorder %s20, 0
    %p213 = por %p211, %p212
    %p214 = scmp.ne.s32.totalorder %s206, %s208
    %p215 = scmp.eq.s32.totalorder %s25, 1
    %p216 = por %p214, %p215
    %p217 = scmp.ne.s32.totalorder %s208, %s209
    %p218 = scmp.eq.s32.totalorder %s25, 0
    %p219 = por %p217, %p218
    %p220 = scmp.ne.s32.totalorder %s208, %s209
    %p221 = scmp.eq.s32.totalorder %s26, 1
    %p222 = por %p220, %p221
    %p224 = scmp.ne.s32.totalorder %s209, %s223
    %p225 = scmp.eq.s32.totalorder %s26, 0
    %p226 = por %p224, %p225
    %s228 = sadd.s32 %s227, 1
    %p231 = scmp.eq.s32.totalorder %s20, 1
    %p232 = scmp.ne.s32.totalorder %s227, %s229
    %p233 = scmp.eq.s32.totalorder %s20, 0
    %p234 = por %p232, %p233
    %p235 = scmp.ne.s32.totalorder %s227, %s229
    %p236 = scmp.eq.s32.totalorder %s25, 1
    %p237 = por %p235, %p236
    %p238 = scmp.ne.s32.totalorder %s229, %s230
    %p239 = scmp.eq.s32.totalorder %s25, 0
    %p240 = por %p238, %p239
    %p241 = scmp.ne.s32.totalorder %s229, %s230
    %p242 = scmp.eq.s32.totalorder %s26, 1
    %p243 = por %p241, %p242
    %p245 = scmp.ne.s32.totalorder %s230, %s244
    %p246 = scmp.eq.s32.totalorder %s26, 0
    %p247 = por %p245, %p246
    %s249 = sadd.s32 %s248, 1
    %p252 = scmp.eq.s32.totalorder %s20, 1
    %p253 = scmp.ne.s32.totalorder %s248, %s250
    %p254 = scmp.eq.s32.totalorder %s20, 0
    %p255 = por %p253, %p254
    %p256 = scmp.ne.s32.totalorder %s248, %s250
    %p257 = scmp.eq.s32.totalorder %s25, 1
    %p258 = por %p256, %p257
    %p259 = scmp.ne.s32.totalorder %s250, %s251
    %p260 = scmp.eq.s32.totalorder %s25, 0
    %p261 = por %p259, %p260
    %p262 = scmp.ne.s32.totalorder %s250, %s251
    %p263 = scmp.eq.s32.totalorder %s26, 1
    %p264 = por %p262, %p263
    %p266 = scmp.ne.s32.totalorder %s251, %s265
    %p267 = scmp.eq.s32.totalorder %s26, 0
    %p268 = por %p266, %p267
    %s270 = sadd.s32 %s269, 1
    %p273 = scmp.eq.s32.totalorder %s20, 1
    %p274 = scmp.ne.s32.totalorder %s269, %s271
    %p275 = scmp.eq.s32.totalorder %s20, 0
    %p276 = por %p274, %p275
    %p277 = scmp.ne.s32.totalorder %s269, %s271
    %p278 = scmp.eq.s32.totalorder %s25, 1
    %p279 = por %p277, %p278
    %p280 = scmp.ne.s32.totalorder %s271, %s272
    %p281 = scmp.eq.s32.totalorder %s25, 0
    %p282 = por %p280, %p281
    %p283 = scmp.ne.s32.totalorder %s271, %s272
    %p284 = scmp.eq.s32.totalorder %s26, 1
    %p285 = por %p283, %p284
    %p287 = scmp.ne.s32.totalorder %s272, %s286
    %p288 = scmp.eq.s32.totalorder %s26, 0
    %p289 = por %p287, %p288
    %s291 = sadd.s32 %s290, 1
    %p294 = scmp.eq.s32.totalorder %s20, 1
    %p295 = scmp.ne.s32.totalorder %s290, %s292
    %p296 = scmp.eq.s32.totalorder %s20, 0
    %p297 = por %p295, %p296
    %p298 = scmp.ne.s32.totalorder %s290, %s292
    %p299 = scmp.eq.s32.totalorder %s25, 1
    %p300 = por %p298, %p299
    %p301 = scmp.ne.s32.totalorder %s292, %s293
    %p302 = scmp.eq.s32.totalorder %s25, 0
    %p303 = por %p301, %p302
    %p304 = scmp.ne.s32.totalorder %s292, %s293
    %p305 = scmp.eq.s32.totalorder %s26, 1
    %p306 = por %p304, %p305
    %p308 = scmp.ne.s32.totalorder %s293, %s307
    %p309 = scmp.eq.s32.totalorder %s26, 0
    %p310 = por %p308, %p309
    %s312 = sadd.s32 %s311, 1
    %p315 = scmp.eq.s32.totalorder %s20, 1
    %p316 = scmp.ne.s32.totalorder %s311, %s313
    %p317 = scmp.eq.s32.totalorder %s20, 0
    %p318 = por %p316, %p317
    %p319 = scmp.ne.s32.totalorder %s311, %s313
    %p320 = scmp.eq.s32.totalorder %s25, 1
    %p321 = por %p319, %p320
    %p322 = scmp.ne.s32.totalorder %s313, %s314
    %p323 = scmp.eq.s32.totalorder %s25, 0
    %p324 = por %p322, %p323
    %p325 = scmp.ne.s32.totalorder %s313, %s314
    %p326 = scmp.eq.s32.totalorder %s26, 1
    %p327 = por %p325, %p326
    %p329 = scmp.ne.s32.totalorder %s314, %s328
    %p330 = scmp.eq.s32.totalorder %s26, 0
    %p331 = por %p329, %p330
    %s332 = ssub.s32 %s20, %s27
    %p333 = scmp.eq.s32.totalorder %s332, 0
    %s335 = sadd.s32 %s334, 1
    %s336 = scalar_select %p333, %s334, %s335
    %p339 = pneg %p333
    %p340 = scmp.eq.s32.totalorder %s20, 1
    %p341 = por %p339, %p340
    %p342 = scmp.ne.s32.totalorder %s334, %s337
    %p343 = scmp.eq.s32.totalorder %s20, 0
    %p344 = por %p342, %p343
    %p345 = scmp.ne.s32.totalorder %s334, %s337
    %p346 = scmp.eq.s32.totalorder %s25, 1
    %p347 = por %p345, %p346
    %p348 = scmp.ne.s32.totalorder %s337, %s338
    %p349 = scmp.eq.s32.totalorder %s25, 0
    %p350 = por %p348, %p349
    %p351 = scmp.ne.s32.totalorder %s337, %s338
    %p352 = scmp.eq.s32.totalorder %s26, 1
    %p353 = por %p351, %p352
    %p355 = scmp.ne.s32.totalorder %s338, %s354
    %p356 = scmp.eq.s32.totalorder %s26, 0
    %p357 = por %p355, %p356
    %p358 = scmp.le.s32.totalorder 1, %s20
    %p359 = scmp.lt.s32.totalorder %s20, 3
    %p360 = pnand %p358, %p359
    %p361 = pneg %p360
    // Predicated region
    $region9: #{vae_forward.1} parent=5 // pred_check
      _
    $region10: #{vae_forward.1} parent=5 // pred_check_branch
      %363 = sbr.rel (%p360) target = $region12
    $region11: #{vae_forward.1} parent=5 // pred_region
      %s364 = ssub.s32 %s20, 1
      // Predicated region
      $region13: #{vae_forward.1} parent=11 // pred_check
        %p365 = pneg %p93
      $region14: #{vae_forward.1} parent=11 // pred_check_branch
        %367 = sbr.rel (%p365) target = $region16
      $region15: #{vae_forward.1} parent=11 // pred_region
        _
      $region16: #{vae_forward.1} parent=11 // pred_fallthru
        _
      // Predicated region
      $region17: #{vae_forward.1} parent=11 // pred_check
        %p368 = pneg %p114
      $region18: #{vae_forward.1} parent=11 // pred_check_branch
        %370 = sbr.rel (%p368) target = $region20
      $region19: #{vae_forward.1} parent=11 // pred_region
        _
      $region20: #{vae_forward.1} parent=11 // pred_fallthru
        _
      // Predicated region
      $region21: #{vae_forward.1} parent=11 // pred_check
        %p371 = pneg %p135
      $region22: #{vae_forward.1} parent=11 // pred_check_branch
        %373 = sbr.rel (%p371) target = $region24
      $region23: #{vae_forward.1} parent=11 // pred_region
        _
      $region24: #{vae_forward.1} parent=11 // pred_fallthru
        _
      // Predicated region
      $region25: #{vae_forward.1} parent=11 // pred_check
        %p374 = pneg %p156
      $region26: #{vae_forward.1} parent=11 // pred_check_branch
        %376 = sbr.rel (%p374) target = $region28
      $region27: #{vae_forward.1} parent=11 // pred_region
        _
      $region28: #{vae_forward.1} parent=11 // pred_fallthru
        _
      // Predicated region
      $region29: #{vae_forward.1} parent=11 // pred_check
        %p377 = pneg %p177
      $region30: #{vae_forward.1} parent=11 // pred_check_branch
        %379 = sbr.rel (%p377) target = $region32
      $region31: #{vae_forward.1} parent=11 // pred_region
        _
      $region32: #{vae_forward.1} parent=11 // pred_fallthru
        _
      // Predicated region
      $region33: #{vae_forward.1} parent=11 // pred_check
        %p380 = pneg %p198
      $region34: #{vae_forward.1} parent=11 // pred_check_branch
        %382 = sbr.rel (%p380) target = $region36
      $region35: #{vae_forward.1} parent=11 // pred_region
        _
      $region36: #{vae_forward.1} parent=11 // pred_fallthru
        _
      // Predicated region
      $region37: #{vae_forward.1} parent=11 // pred_check
        %p383 = pneg %p219
      $region38: #{vae_forward.1} parent=11 // pred_check_branch
        %385 = sbr.rel (%p383) target = $region40
      $region39: #{vae_forward.1} parent=11 // pred_region
        _
      $region40: #{vae_forward.1} parent=11 // pred_fallthru
        _
      // Predicated region
      $region41: #{vae_forward.1} parent=11 // pred_check
        %p386 = pneg %p240
      $region42: #{vae_forward.1} parent=11 // pred_check_branch
        %388 = sbr.rel (%p386) target = $region44
      $region43: #{vae_forward.1} parent=11 // pred_region
        _
      $region44: #{vae_forward.1} parent=11 // pred_fallthru
        _
      // Predicated region
      $region45: #{vae_forward.1} parent=11 // pred_check
        %p389 = pneg %p261
      $region46: #{vae_forward.1} parent=11 // pred_check_branch
        %391 = sbr.rel (%p389) target = $region48
      $region47: #{vae_forward.1} parent=11 // pred_region
        _
      $region48: #{vae_forward.1} parent=11 // pred_fallthru
        _
      // Predicated region
      $region49: #{vae_forward.1} parent=11 // pred_check
        %p392 = pneg %p282
      $region50: #{vae_forward.1} parent=11 // pred_check_branch
        %394 = sbr.rel (%p392) target = $region52
      $region51: #{vae_forward.1} parent=11 // pred_region
        _
      $region52: #{vae_forward.1} parent=11 // pred_fallthru
        _
      // Predicated region
      $region53: #{vae_forward.1} parent=11 // pred_check
        %p395 = pneg %p303
      $region54: #{vae_forward.1} parent=11 // pred_check_branch
        %397 = sbr.rel (%p395) target = $region56
      $region55: #{vae_forward.1} parent=11 // pred_region
        _
      $region56: #{vae_forward.1} parent=11 // pred_fallthru
        _
      // Predicated region
      $region57: #{vae_forward.1} parent=11 // pred_check
        %p398 = pneg %p324
      $region58: #{vae_forward.1} parent=11 // pred_check_branch
        %400 = sbr.rel (%p398) target = $region60
      $region59: #{vae_forward.1} parent=11 // pred_region
        _
      $region60: #{vae_forward.1} parent=11 // pred_fallthru
        _
    $region12: #{vae_forward.1} parent=5 // pred_fallthru
      _
    %p401 = scmp.lt.s32.totalorder %s20, 2
    // Predicated region
    $region61: #{vae_forward.1} parent=5 // pred_check
      %p402 = pneg %p401
    $region62: #{vae_forward.1} parent=5 // pred_check_branch
      %404 = sbr.rel (%p402) target = $region64
    $region63: #{vae_forward.1} parent=5 // pred_region
      // Predicated region
      $region65: #{vae_forward.1} parent=63 // pred_check
        %p405 = pneg %p40
      $region66: #{vae_forward.1} parent=63 // pred_check_branch
        %407 = sbr.rel (%p405) target = $region68
      $region67: #{vae_forward.1} parent=63 // pred_region
        %s408 = smul.u32 16, %s20
        %p409 = scmp.lt.s32.totalorder %s408, 31
        %s410 = scalar_select %p409, %s408, 31
        %s411 = smul.addr %s410, 8
        %s412 = scalar_lea.vmem %s0, %s411
        %s413 = smul.u32 16, %s20
      $region68: #{vae_forward.1} parent=63 // pred_fallthru
        _
      // Predicated region
      $region69: #{vae_forward.1} parent=63 // pred_check
        %p414 = pneg %p66
      $region70: #{vae_forward.1} parent=63 // pred_check_branch
        %416 = sbr.rel (%p414) target = $region72
      $region71: #{vae_forward.1} parent=63 // pred_region
        %s417 = smul.u32 16, %s20
        %p418 = scmp.lt.s32.totalorder %s417, 31
        %s419 = scalar_select %p418, %s417, 31
        %s420 = smul.addr %s419, 8
        %s421 = scalar_lea.vmem %s1, %s420
        %s422 = smul.u32 16, %s20
      $region72: #{vae_forward.1} parent=63 // pred_fallthru
        _
    $region64: #{vae_forward.1} parent=5 // pred_fallthru
      _
    %p423 = scmp.le.s32.totalorder 1, %s20
    %p424 = scmp.lt.s32.totalorder %s20, 3
    %p425 = pnand %p423, %p424
    %p426 = pneg %p425
    // Predicated region
    $region73: #{vae_forward.1} parent=5 // pred_check
      _
    $region74: #{vae_forward.1} parent=5 // pred_check_branch
      %428 = sbr.rel (%p425) target = $region76
    $region75: #{vae_forward.1} parent=5 // pred_region
      %s429 = ssub.s32 %s20, 1
      %s430 = smul.u32 16, %s25
      %p431 = scmp.lt.s32.totalorder %s430, 31
      %s432 = scalar_select %p431, %s430, 31
      %s433 = smul.addr %s432, 8
      %s434 = scalar_lea.vmem %s0, %s433
      %p435 = pneg %p46
      %p436 = pneg %p43
      %s437 = smul.u32 16, %s25
      %p438 = scmp.lt.s32.totalorder %s437, 31
      %s439 = scalar_select %p438, %s437, 31
      %s440 = smul.addr %s439, 8
      %s441 = scalar_lea.vmem %s1, %s440
      %p442 = pneg %p72
      %p443 = pneg %p69
      %p444 = pneg %p93
      %p445 = pneg %p90
      %p446 = pneg %p114
      %p447 = pneg %p111
      %p448 = pneg %p135
      %p449 = pneg %p132
      %p450 = pneg %p156
      %p451 = pneg %p153
      %p452 = pneg %p177
      %p453 = pneg %p174
      %p454 = pneg %p198
      %p455 = pneg %p195
      %p456 = pneg %p219
      %p457 = pneg %p216
      %p458 = pneg %p240
      %p459 = pneg %p237
      %p460 = pneg %p261
      %p461 = pneg %p258
      %p462 = pneg %p282
      %p463 = pneg %p279
      %p464 = pneg %p303
      %p465 = pneg %p300
      %p466 = pneg %p324
      %p467 = pneg %p321
      %p468 = pneg %p350
      %p469 = pneg %p347
      %s470 = smul.u32 16, %s25
      %p471 = scmp.lt.s32.totalorder %s470, 31
      %s472 = scalar_select %p471, %s470, 31
      %s473 = smul.addr %s472, 8
      %s474 = scalar_lea.vmem %s14, %s473
      %s475 = smul.u32 16, %s25
      %p476 = scmp.lt.s32.totalorder %s475, 31
      %s477 = scalar_select %p476, %s475, 31
      %s478 = smul.addr %s477, 8
      %s479 = scalar_lea.vmem %s0, %s478
      %s480 = smul.u32 16, %s25
      %s481 = smul.u32 16, %s25
      %p482 = scmp.lt.s32.totalorder %s481, 31
      %s483 = scalar_select %p482, %s481, 31
      %s484 = smul.addr %s483, 8
      %s485 = scalar_lea.vmem %s1, %s484
      %s486 = smul.u32 16, %s25
      %s487 = smul.u32 16, %s25
      %p488 = scmp.lt.s32.totalorder %s487, 31
      %s489 = scalar_select %p488, %s487, 31
      %s490 = smul.addr %s489, 8
      %s491 = scalar_lea.vmem %s14, %s490
      %s492 = smul.u32 16, %s25
      %v494 = vld [vmem:[%s479] sm:$0xff]
      %v495 = vld [vmem:[%s479 + $0x8] sm:$0xff]
      %v496 = vld [vmem:[%s479 + $0x10] sm:$0xff]
      %v497 = vld [vmem:[%s479 + $0x18] sm:$0xff]
      %v498 = vld [vmem:[%s479 + $0x20] sm:$0xff]
      %v499 = vld [vmem:[%s479 + $0x28] sm:$0xff]
      %v500 = vld [vmem:[%s479 + $0x30] sm:$0xff]
      %v501 = vld [vmem:[%s479 + $0x38] sm:$0xff]
      %v502 = vld [vmem:[%s479 + $0x40] sm:$0xff]
      %v503 = vld [vmem:[%s479 + $0x48] sm:$0xff]
      %v504 = vld [vmem:[%s479 + $0x50] sm:$0xff]
      %v505 = vld [vmem:[%s479 + $0x58] sm:$0xff]
      %v506 = vld [vmem:[%s479 + $0x60] sm:$0xff]
      %v507 = vld [vmem:[%s479 + $0x68] sm:$0xff]
      %v508 = vld [vmem:[%s479 + $0x70] sm:$0xff]
      %v509 = vld [vmem:[%s479 + $0x78] sm:$0xff]
      %v510 = vld [vmem:[%s485] sm:$0xff]
      %v511 = vld [vmem:[%s485 + $0x8] sm:$0xff]
      %v512 = vld [vmem:[%s485 + $0x10] sm:$0xff]
      %v513 = vld [vmem:[%s485 + $0x18] sm:$0xff]
      %v514 = vld [vmem:[%s485 + $0x20] sm:$0xff]
      %v515 = vld [vmem:[%s485 + $0x28] sm:$0xff]
      %v516 = vld [vmem:[%s485 + $0x30] sm:$0xff]
      %v517 = vld [vmem:[%s485 + $0x38] sm:$0xff]
      %v518 = vld [vmem:[%s485 + $0x40] sm:$0xff]
      %v519 = vld [vmem:[%s485 + $0x48] sm:$0xff]
      %v520 = vld [vmem:[%s485 + $0x50] sm:$0xff]
      %v521 = vld [vmem:[%s485 + $0x58] sm:$0xff]
      %v522 = vld [vmem:[%s485 + $0x60] sm:$0xff]
      %v523 = vld [vmem:[%s485 + $0x68] sm:$0xff]
      %v524 = vld [vmem:[%s485 + $0x70] sm:$0xff]
      %v525 = vld [vmem:[%s485 + $0x78] sm:$0xff]
      %v526 = vld [vmem:[%s2] ss:$4 sm:$0x3]
      %528 = vset.pattern.permute.xlu0 0
      %529 = vperm.xlu0 %528, %v494
      %v530 = vpop.permute.xlu0 %529
      %533 = vset.pattern.permute.xlu0 0
      %534 = vperm.xlu0 %533, %v495
      %v535 = vpop.permute.xlu0 %534
      %538 = vset.pattern.permute.xlu0 0
      %539 = vperm.xlu0 %538, %v496
      %v540 = vpop.permute.xlu0 %539
      %543 = vset.pattern.permute.xlu0 0
      %544 = vperm.xlu0 %543, %v497
      %v545 = vpop.permute.xlu0 %544
      %548 = vset.pattern.permute.xlu0 0
      %549 = vperm.xlu0 %548, %v498
      %v550 = vpop.permute.xlu0 %549
      %553 = vset.pattern.permute.xlu0 0
      %554 = vperm.xlu0 %553, %v499
      %v555 = vpop.permute.xlu0 %554
      %558 = vset.pattern.permute.xlu0 0
      %559 = vperm.xlu0 %558, %v500
      %v560 = vpop.permute.xlu0 %559
      %563 = vset.pattern.permute.xlu0 0
      %564 = vperm.xlu0 %563, %v501
      %v565 = vpop.permute.xlu0 %564
      %568 = vset.pattern.permute.xlu0 0
      %569 = vperm.xlu0 %568, %v502
      %v570 = vpop.permute.xlu0 %569
      %573 = vset.pattern.permute.xlu0 0
      %574 = vperm.xlu0 %573, %v503
      %v575 = vpop.permute.xlu0 %574
      %578 = vset.pattern.permute.xlu0 0
      %579 = vperm.xlu0 %578, %v504
      %v580 = vpop.permute.xlu0 %579
      %583 = vset.pattern.permute.xlu0 0
      %584 = vperm.xlu0 %583, %v505
      %v585 = vpop.permute.xlu0 %584
      %588 = vset.pattern.permute.xlu0 0
      %589 = vperm.xlu0 %588, %v506
      %v590 = vpop.permute.xlu0 %589
      %593 = vset.pattern.permute.xlu0 0
      %594 = vperm.xlu0 %593, %v507
      %v595 = vpop.permute.xlu0 %594
      %598 = vset.pattern.permute.xlu0 0
      %599 = vperm.xlu0 %598, %v508
      %v600 = vpop.permute.xlu0 %599
      %603 = vset.pattern.permute.xlu0 0
      %604 = vperm.xlu0 %603, %v509
      %v605 = vpop.permute.xlu0 %604
      %v608 = vperm.slane %v526, 0
      %v609 = vperm.slane %v526, 1
      %v612 = vmul.f32 %v530, %v608
      %v613 = vmul.f32 %v530, %v609
      %v614 = vmul.f32 %v535, %v608
      %v615 = vmul.f32 %v535, %v609
      %v616 = vmul.f32 %v540, %v608
      %v617 = vmul.f32 %v540, %v609
      %v618 = vmul.f32 %v545, %v608
      %v619 = vmul.f32 %v545, %v609
      %v620 = vmul.f32 %v550, %v608
      %v621 = vmul.f32 %v550, %v609
      %v622 = vmul.f32 %v555, %v608
      %v623 = vmul.f32 %v555, %v609
      %v624 = vmul.f32 %v560, %v608
      %v625 = vmul.f32 %v560, %v609
      %v626 = vmul.f32 %v565, %v608
      %v627 = vmul.f32 %v565, %v609
      %v628 = vmul.f32 %v570, %v608
      %v629 = vmul.f32 %v570, %v609
      %v630 = vmul.f32 %v575, %v608
      %v631 = vmul.f32 %v575, %v609
      %v632 = vmul.f32 %v580, %v608
      %v633 = vmul.f32 %v580, %v609
      %v634 = vmul.f32 %v585, %v608
      %v635 = vmul.f32 %v585, %v609
      %v636 = vmul.f32 %v590, %v608
      %v637 = vmul.f32 %v590, %v609
      %v638 = vmul.f32 %v595, %v608
      %v639 = vmul.f32 %v595, %v609
      %v640 = vmul.f32 %v600, %v608
      %v641 = vmul.f32 %v600, %v609
      %v642 = vmul.f32 %v605, %v608
      %v643 = vmul.f32 %v605, %v609
      %s644 = scalar_lea.vmem %s2, 1
      %v645 = vld [vmem:[%s644] ss:$4 sm:$0x3]
      %646 = vset.pattern.permute.xlu0 1
      %647 = vperm.xlu0 %646, %v494
      %v648 = vpop.permute.xlu0 %647
      %650 = vset.pattern.permute.xlu0 1
      %651 = vperm.xlu0 %650, %v495
      %v652 = vpop.permute.xlu0 %651
      %654 = vset.pattern.permute.xlu0 1
      %655 = vperm.xlu0 %654, %v496
      %v656 = vpop.permute.xlu0 %655
      %658 = vset.pattern.permute.xlu0 1
      %659 = vperm.xlu0 %658, %v497
      %v660 = vpop.permute.xlu0 %659
      %662 = vset.pattern.permute.xlu0 1
      %663 = vperm.xlu0 %662, %v498
      %v664 = vpop.permute.xlu0 %663
      %666 = vset.pattern.permute.xlu0 1
      %667 = vperm.xlu0 %666, %v499
      %v668 = vpop.permute.xlu0 %667
      %670 = vset.pattern.permute.xlu0 1
      %671 = vperm.xlu0 %670, %v500
      %v672 = vpop.permute.xlu0 %671
      %674 = vset.pattern.permute.xlu0 1
      %675 = vperm.xlu0 %674, %v501
      %v676 = vpop.permute.xlu0 %675
      %678 = vset.pattern.permute.xlu0 1
      %679 = vperm.xlu0 %678, %v502
      %v680 = vpop.permute.xlu0 %679
      %682 = vset.pattern.permute.xlu0 1
      %683 = vperm.xlu0 %682, %v503
      %v684 = vpop.permute.xlu0 %683
      %686 = vset.pattern.permute.xlu0 1
      %687 = vperm.xlu0 %686, %v504
      %v688 = vpop.permute.xlu0 %687
      %690 = vset.pattern.permute.xlu0 1
      %691 = vperm.xlu0 %690, %v505
      %v692 = vpop.permute.xlu0 %691
      %694 = vset.pattern.permute.xlu0 1
      %695 = vperm.xlu0 %694, %v506
      %v696 = vpop.permute.xlu0 %695
      %698 = vset.pattern.permute.xlu0 1
      %699 = vperm.xlu0 %698, %v507
      %v700 = vpop.permute.xlu0 %699
      %702 = vset.pattern.permute.xlu0 1
      %703 = vperm.xlu0 %702, %v508
      %v704 = vpop.permute.xlu0 %703
      %706 = vset.pattern.permute.xlu0 1
      %707 = vperm.xlu0 %706, %v509
      %v708 = vpop.permute.xlu0 %707
      %v711 = vperm.slane %v645, 0
      %v712 = vperm.slane %v645, 1
      %v715 = vmul.f32 %v648, %v711
      %v716 = vmul.f32 %v648, %v712
      %v717 = vmul.f32 %v652, %v711
      %v718 = vmul.f32 %v652, %v712
      %v719 = vmul.f32 %v656, %v711
      %v720 = vmul.f32 %v656, %v712
      %v721 = vmul.f32 %v660, %v711
      %v722 = vmul.f32 %v660, %v712
      %v723 = vmul.f32 %v664, %v711
      %v724 = vmul.f32 %v664, %v712
      %v725 = vmul.f32 %v668, %v711
      %v726 = vmul.f32 %v668, %v712
      %v727 = vmul.f32 %v672, %v711
      %v728 = vmul.f32 %v672, %v712
      %v729 = vmul.f32 %v676, %v711
      %v730 = vmul.f32 %v676, %v712
      %v731 = vmul.f32 %v680, %v711
      %v732 = vmul.f32 %v680, %v712
      %v733 = vmul.f32 %v684, %v711
      %v734 = vmul.f32 %v684, %v712
      %v735 = vmul.f32 %v688, %v711
      %v736 = vmul.f32 %v688, %v712
      %v737 = vmul.f32 %v692, %v711
      %v738 = vmul.f32 %v692, %v712
      %v739 = vmul.f32 %v696, %v711
      %v740 = vmul.f32 %v696, %v712
      %v741 = vmul.f32 %v700, %v711
      %v742 = vmul.f32 %v700, %v712
      %v743 = vmul.f32 %v704, %v711
      %v744 = vmul.f32 %v704, %v712
      %v745 = vmul.f32 %v708, %v711
      %v746 = vmul.f32 %v708, %v712
      %v747 = vadd.f32 %v612, %v715
      %v748 = vadd.f32 %v613, %v716
      %v749 = vadd.f32 %v614, %v717
      %v750 = vadd.f32 %v615, %v718
      %v751 = vadd.f32 %v616, %v719
      %v752 = vadd.f32 %v617, %v720
      %v753 = vadd.f32 %v618, %v721
      %v754 = vadd.f32 %v619, %v722
      %v755 = vadd.f32 %v620, %v723
      %v756 = vadd.f32 %v621, %v724
      %v757 = vadd.f32 %v622, %v725
      %v758 = vadd.f32 %v623, %v726
      %v759 = vadd.f32 %v624, %v727
      %v760 = vadd.f32 %v625, %v728
      %v761 = vadd.f32 %v626, %v729
      %v762 = vadd.f32 %v627, %v730
      %v763 = vadd.f32 %v628, %v731
      %v764 = vadd.f32 %v629, %v732
      %v765 = vadd.f32 %v630, %v733
      %v766 = vadd.f32 %v631, %v734
      %v767 = vadd.f32 %v632, %v735
      %v768 = vadd.f32 %v633, %v736
      %v769 = vadd.f32 %v634, %v737
      %v770 = vadd.f32 %v635, %v738
      %v771 = vadd.f32 %v636, %v739
      %v772 = vadd.f32 %v637, %v740
      %v773 = vadd.f32 %v638, %v741
      %v774 = vadd.f32 %v639, %v742
      %v775 = vadd.f32 %v640, %v743
      %v776 = vadd.f32 %v641, %v744
      %v777 = vadd.f32 %v642, %v745
      %v778 = vadd.f32 %v643, %v746
      %s779 = scalar_lea.vmem %s2, 2
      %v780 = vld [vmem:[%s779] ss:$4 sm:$0x3]
      %781 = vset.pattern.permute.xlu0 2
      %782 = vperm.xlu0 %781, %v494
      %v783 = vpop.permute.xlu0 %782
      %785 = vset.pattern.permute.xlu0 2
      %786 = vperm.xlu0 %785, %v495
      %v787 = vpop.permute.xlu0 %786
      %789 = vset.pattern.permute.xlu0 2
      %790 = vperm.xlu0 %789, %v496
      %v791 = vpop.permute.xlu0 %790
      %793 = vset.pattern.permute.xlu0 2
      %794 = vperm.xlu0 %793, %v497
      %v795 = vpop.permute.xlu0 %794
      %797 = vset.pattern.permute.xlu0 2
      %798 = vperm.xlu0 %797, %v498
      %v799 = vpop.permute.xlu0 %798
      %801 = vset.pattern.permute.xlu0 2
      %802 = vperm.xlu0 %801, %v499
      %v803 = vpop.permute.xlu0 %802
      %805 = vset.pattern.permute.xlu0 2
      %806 = vperm.xlu0 %805, %v500
      %v807 = vpop.permute.xlu0 %806
      %809 = vset.pattern.permute.xlu0 2
      %810 = vperm.xlu0 %809, %v501
      %v811 = vpop.permute.xlu0 %810
      %813 = vset.pattern.permute.xlu0 2
      %814 = vperm.xlu0 %813, %v502
      %v815 = vpop.permute.xlu0 %814
      %817 = vset.pattern.permute.xlu0 2
      %818 = vperm.xlu0 %817, %v503
      %v819 = vpop.permute.xlu0 %818
      %821 = vset.pattern.permute.xlu0 2
      %822 = vperm.xlu0 %821, %v504
      %v823 = vpop.permute.xlu0 %822
      %825 = vset.pattern.permute.xlu0 2
      %826 = vperm.xlu0 %825, %v505
      %v827 = vpop.permute.xlu0 %826
      %829 = vset.pattern.permute.xlu0 2
      %830 = vperm.xlu0 %829, %v506
      %v831 = vpop.permute.xlu0 %830
      %833 = vset.pattern.permute.xlu0 2
      %834 = vperm.xlu0 %833, %v507
      %v835 = vpop.permute.xlu0 %834
      %837 = vset.pattern.permute.xlu0 2
      %838 = vperm.xlu0 %837, %v508
      %v839 = vpop.permute.xlu0 %838
      %841 = vset.pattern.permute.xlu0 2
      %842 = vperm.xlu0 %841, %v509
      %v843 = vpop.permute.xlu0 %842
      %v846 = vperm.slane %v780, 0
      %v847 = vperm.slane %v780, 1
      %v850 = vmul.f32 %v783, %v846
      %v851 = vmul.f32 %v783, %v847
      %v852 = vmul.f32 %v787, %v846
      %v853 = vmul.f32 %v787, %v847
      %v854 = vmul.f32 %v791, %v846
      %v855 = vmul.f32 %v791, %v847
      %v856 = vmul.f32 %v795, %v846
      %v857 = vmul.f32 %v795, %v847
      %v858 = vmul.f32 %v799, %v846
      %v859 = vmul.f32 %v799, %v847
      %v860 = vmul.f32 %v803, %v846
      %v861 = vmul.f32 %v803, %v847
      %v862 = vmul.f32 %v807, %v846
      %v863 = vmul.f32 %v807, %v847
      %v864 = vmul.f32 %v811, %v846
      %v865 = vmul.f32 %v811, %v847
      %v866 = vmul.f32 %v815, %v846
      %v867 = vmul.f32 %v815, %v847
      %v868 = vmul.f32 %v819, %v846
      %v869 = vmul.f32 %v819, %v847
      %v870 = vmul.f32 %v823, %v846
      %v871 = vmul.f32 %v823, %v847
      %v872 = vmul.f32 %v827, %v846
      %v873 = vmul.f32 %v827, %v847
      %v874 = vmul.f32 %v831, %v846
      %v875 = vmul.f32 %v831, %v847
      %v876 = vmul.f32 %v835, %v846
      %v877 = vmul.f32 %v835, %v847
      %v878 = vmul.f32 %v839, %v846
      %v879 = vmul.f32 %v839, %v847
      %v880 = vmul.f32 %v843, %v846
      %v881 = vmul.f32 %v843, %v847
      %v882 = vadd.f32 %v747, %v850
      %v883 = vadd.f32 %v748, %v851
      %v884 = vadd.f32 %v749, %v852
      %v885 = vadd.f32 %v750, %v853
      %v886 = vadd.f32 %v751, %v854
      %v887 = vadd.f32 %v752, %v855
      %v888 = vadd.f32 %v753, %v856
      %v889 = vadd.f32 %v754, %v857
      %v890 = vadd.f32 %v755, %v858
      %v891 = vadd.f32 %v756, %v859
      %v892 = vadd.f32 %v757, %v860
      %v893 = vadd.f32 %v758, %v861
      %v894 = vadd.f32 %v759, %v862
      %v895 = vadd.f32 %v760, %v863
      %v896 = vadd.f32 %v761, %v864
      %v897 = vadd.f32 %v762, %v865
      %v898 = vadd.f32 %v763, %v866
      %v899 = vadd.f32 %v764, %v867
      %v900 = vadd.f32 %v765, %v868
      %v901 = vadd.f32 %v766, %v869
      %v902 = vadd.f32 %v767, %v870
      %v903 = vadd.f32 %v768, %v871
      %v904 = vadd.f32 %v769, %v872
      %v905 = vadd.f32 %v770, %v873
      %v906 = vadd.f32 %v771, %v874
      %v907 = vadd.f32 %v772, %v875
      %v908 = vadd.f32 %v773, %v876
      %v909 = vadd.f32 %v774, %v877
      %v910 = vadd.f32 %v775, %v878
      %v911 = vadd.f32 %v776, %v879
      %v912 = vadd.f32 %v777, %v880
      %v913 = vadd.f32 %v778, %v881
      %v914 = vld [vmem:[%s3] sm:$0x3]
      %v916 = vperm.slane %v914, 0
      %v917 = vperm.slane %v914, 1
      %v920 = vadd.f32 %v882, %v916
      %v921 = vadd.f32 %v883, %v917
      %v922 = vadd.f32 %v884, %v916
      %v923 = vadd.f32 %v885, %v917
      %v924 = vadd.f32 %v886, %v916
      %v925 = vadd.f32 %v887, %v917
      %v926 = vadd.f32 %v888, %v916
      %v927 = vadd.f32 %v889, %v917
      %v928 = vadd.f32 %v890, %v916
      %v929 = vadd.f32 %v891, %v917
      %v930 = vadd.f32 %v892, %v916
      %v931 = vadd.f32 %v893, %v917
      %v932 = vadd.f32 %v894, %v916
      %v933 = vadd.f32 %v895, %v917
      %v934 = vadd.f32 %v896, %v916
      %v935 = vadd.f32 %v897, %v917
      %v936 = vadd.f32 %v898, %v916
      %v937 = vadd.f32 %v899, %v917
      %v938 = vadd.f32 %v900, %v916
      %v939 = vadd.f32 %v901, %v917
      %v940 = vadd.f32 %v902, %v916
      %v941 = vadd.f32 %v903, %v917
      %v942 = vadd.f32 %v904, %v916
      %v943 = vadd.f32 %v905, %v917
      %v944 = vadd.f32 %v906, %v916
      %v945 = vadd.f32 %v907, %v917
      %v946 = vadd.f32 %v908, %v916
      %v947 = vadd.f32 %v909, %v917
      %v948 = vadd.f32 %v910, %v916
      %v949 = vadd.f32 %v911, %v917
      %v950 = vadd.f32 %v912, %v916
      %v951 = vadd.f32 %v913, %v917
      %v952 = vmax.f32 %v920, 0.0
      %v953 = vmax.f32 %v921, 0.0
      %v954 = vmax.f32 %v922, 0.0
      %v955 = vmax.f32 %v923, 0.0
      %v956 = vmax.f32 %v924, 0.0
      %v957 = vmax.f32 %v925, 0.0
      %v958 = vmax.f32 %v926, 0.0
      %v959 = vmax.f32 %v927, 0.0
      %v960 = vmax.f32 %v928, 0.0
      %v961 = vmax.f32 %v929, 0.0
      %v962 = vmax.f32 %v930, 0.0
      %v963 = vmax.f32 %v931, 0.0
      %v964 = vmax.f32 %v932, 0.0
      %v965 = vmax.f32 %v933, 0.0
      %v966 = vmax.f32 %v934, 0.0
      %v967 = vmax.f32 %v935, 0.0
      %v968 = vmax.f32 %v936, 0.0
      %v969 = vmax.f32 %v937, 0.0
      %v970 = vmax.f32 %v938, 0.0
      %v971 = vmax.f32 %v939, 0.0
      %v972 = vmax.f32 %v940, 0.0
      %v973 = vmax.f32 %v941, 0.0
      %v974 = vmax.f32 %v942, 0.0
      %v975 = vmax.f32 %v943, 0.0
      %v976 = vmax.f32 %v944, 0.0
      %v977 = vmax.f32 %v945, 0.0
      %v978 = vmax.f32 %v946, 0.0
      %v979 = vmax.f32 %v947, 0.0
      %v980 = vmax.f32 %v948, 0.0
      %v981 = vmax.f32 %v949, 0.0
      %v982 = vmax.f32 %v950, 0.0
      %v983 = vmax.f32 %v951, 0.0
      %v984 = vand.u32 2147483647, %v920
      %v985 = vand.u32 2147483647, %v921
      %v986 = vand.u32 2147483647, %v922
      %v987 = vand.u32 2147483647, %v923
      %v988 = vand.u32 2147483647, %v924
      %v989 = vand.u32 2147483647, %v925
      %v990 = vand.u32 2147483647, %v926
      %v991 = vand.u32 2147483647, %v927
      %v992 = vand.u32 2147483647, %v928
      %v993 = vand.u32 2147483647, %v929
      %v994 = vand.u32 2147483647, %v930
      %v995 = vand.u32 2147483647, %v931
      %v996 = vand.u32 2147483647, %v932
      %v997 = vand.u32 2147483647, %v933
      %v998 = vand.u32 2147483647, %v934
      %v999 = vand.u32 2147483647, %v935
      %v1000 = vand.u32 2147483647, %v936
      %v1001 = vand.u32 2147483647, %v937
      %v1002 = vand.u32 2147483647, %v938
      %v1003 = vand.u32 2147483647, %v939
      %v1004 = vand.u32 2147483647, %v940
      %v1005 = vand.u32 2147483647, %v941
      %v1006 = vand.u32 2147483647, %v942
      %v1007 = vand.u32 2147483647, %v943
      %v1008 = vand.u32 2147483647, %v944
      %v1009 = vand.u32 2147483647, %v945
      %v1010 = vand.u32 2147483647, %v946
      %v1011 = vand.u32 2147483647, %v947
      %v1012 = vand.u32 2147483647, %v948
      %v1013 = vand.u32 2147483647, %v949
      %v1014 = vand.u32 2147483647, %v950
      %v1015 = vand.u32 2147483647, %v951
      %v1016 = vsub.f32 0.0, %v984
      %v1017 = vsub.f32 0.0, %v985
      %v1018 = vsub.f32 0.0, %v986
      %v1019 = vsub.f32 0.0, %v987
      %v1020 = vsub.f32 0.0, %v988
      %v1021 = vsub.f32 0.0, %v989
      %v1022 = vsub.f32 0.0, %v990
      %v1023 = vsub.f32 0.0, %v991
      %v1024 = vsub.f32 0.0, %v992
      %v1025 = vsub.f32 0.0, %v993
      %v1026 = vsub.f32 0.0, %v994
      %v1027 = vsub.f32 0.0, %v995
      %v1028 = vsub.f32 0.0, %v996
      %v1029 = vsub.f32 0.0, %v997
      %v1030 = vsub.f32 0.0, %v998
      %v1031 = vsub.f32 0.0, %v999
      %v1032 = vsub.f32 0.0, %v1000
      %v1033 = vsub.f32 0.0, %v1001
      %v1034 = vsub.f32 0.0, %v1002
      %v1035 = vsub.f32 0.0, %v1003
      %v1036 = vsub.f32 0.0, %v1004
      %v1037 = vsub.f32 0.0, %v1005
      %v1038 = vsub.f32 0.0, %v1006
      %v1039 = vsub.f32 0.0, %v1007
      %v1040 = vsub.f32 0.0, %v1008
      %v1041 = vsub.f32 0.0, %v1009
      %v1042 = vsub.f32 0.0, %v1010
      %v1043 = vsub.f32 0.0, %v1011
      %v1044 = vsub.f32 0.0, %v1012
      %v1045 = vsub.f32 0.0, %v1013
      %v1046 = vsub.f32 0.0, %v1014
      %v1047 = vsub.f32 0.0, %v1015
      %v1048 = vmul.f32 %v1016, 1.442695
      %v1049 = vpow.pop %v1048
      %v1050 = vmul.f32 %v1017, 1.442695
      %v1051 = vpow.pop %v1050
      %v1052 = vmul.f32 %v1018, 1.442695
      %v1053 = vpow.pop %v1052
      %v1054 = vmul.f32 %v1019, 1.442695
      %v1055 = vpow.pop %v1054
      %v1056 = vmul.f32 %v1020, 1.442695
      %v1057 = vpow.pop %v1056
      %v1058 = vmul.f32 %v1021, 1.442695
      %v1059 = vpow.pop %v1058
      %v1060 = vmul.f32 %v1022, 1.442695
      %v1061 = vpow.pop %v1060
      %v1062 = vmul.f32 %v1023, 1.442695
      %v1063 = vpow.pop %v1062
      %v1064 = vmul.f32 %v1024, 1.442695
      %v1065 = vpow.pop %v1064
      %v1066 = vmul.f32 %v1025, 1.442695
      %v1067 = vpow.pop %v1066
      %v1068 = vmul.f32 %v1026, 1.442695
      %v1069 = vpow.pop %v1068
      %v1070 = vmul.f32 %v1027, 1.442695
      %v1071 = vpow.pop %v1070
      %v1072 = vmul.f32 %v1028, 1.442695
      %v1073 = vpow.pop %v1072
      %v1074 = vmul.f32 %v1029, 1.442695
      %v1075 = vpow.pop %v1074
      %v1076 = vmul.f32 %v1030, 1.442695
      %v1077 = vpow.pop %v1076
      %v1078 = vmul.f32 %v1031, 1.442695
      %v1079 = vpow.pop %v1078
      %v1080 = vmul.f32 %v1032, 1.442695
      %v1081 = vpow.pop %v1080
      %v1082 = vmul.f32 %v1033, 1.442695
      %v1083 = vpow.pop %v1082
      %v1084 = vmul.f32 %v1034, 1.442695
      %v1085 = vpow.pop %v1084
      %v1086 = vmul.f32 %v1035, 1.442695
      %v1087 = vpow.pop %v1086
      %v1088 = vmul.f32 %v1036, 1.442695
      %v1089 = vpow.pop %v1088
      %v1090 = vmul.f32 %v1037, 1.442695
      %v1091 = vpow.pop %v1090
      %v1092 = vmul.f32 %v1038, 1.442695
      %v1093 = vpow.pop %v1092
      %v1094 = vmul.f32 %v1039, 1.442695
      %v1095 = vpow.pop %v1094
      %v1096 = vmul.f32 %v1040, 1.442695
      %v1097 = vpow.pop %v1096
      %v1098 = vmul.f32 %v1041, 1.442695
      %v1099 = vpow.pop %v1098
      %v1100 = vmul.f32 %v1042, 1.442695
      %v1101 = vpow.pop %v1100
      %v1102 = vmul.f32 %v1043, 1.442695
      %v1103 = vpow.pop %v1102
      %v1104 = vmul.f32 %v1044, 1.442695
      %v1105 = vpow.pop %v1104
      %v1106 = vmul.f32 %v1045, 1.442695
      %v1107 = vpow.pop %v1106
      %v1108 = vmul.f32 %v1046, 1.442695
      %v1109 = vpow.pop %v1108
      %v1110 = vmul.f32 %v1047, 1.442695
      %v1111 = vpow.pop %v1110
      %v1112 = vadd.f32 %v1049, 1.0
      %v1113 = vadd.f32 %v1051, 1.0
      %v1114 = vadd.f32 %v1053, 1.0
      %v1115 = vadd.f32 %v1055, 1.0
      %v1116 = vadd.f32 %v1057, 1.0
      %v1117 = vadd.f32 %v1059, 1.0
      %v1118 = vadd.f32 %v1061, 1.0
      %v1119 = vadd.f32 %v1063, 1.0
      %v1120 = vadd.f32 %v1065, 1.0
      %v1121 = vadd.f32 %v1067, 1.0
      %v1122 = vadd.f32 %v1069, 1.0
      %v1123 = vadd.f32 %v1071, 1.0
      %v1124 = vadd.f32 %v1073, 1.0
      %v1125 = vadd.f32 %v1075, 1.0
      %v1126 = vadd.f32 %v1077, 1.0
      %v1127 = vadd.f32 %v1079, 1.0
      %v1128 = vadd.f32 %v1081, 1.0
      %v1129 = vadd.f32 %v1083, 1.0
      %v1130 = vadd.f32 %v1085, 1.0
      %v1131 = vadd.f32 %v1087, 1.0
      %v1132 = vadd.f32 %v1089, 1.0
      %v1133 = vadd.f32 %v1091, 1.0
      %v1134 = vadd.f32 %v1093, 1.0
      %v1135 = vadd.f32 %v1095, 1.0
      %v1136 = vadd.f32 %v1097, 1.0
      %v1137 = vadd.f32 %v1099, 1.0
      %v1138 = vadd.f32 %v1101, 1.0
      %v1139 = vadd.f32 %v1103, 1.0
      %v1140 = vadd.f32 %v1105, 1.0
      %v1141 = vadd.f32 %v1107, 1.0
      %v1142 = vadd.f32 %v1109, 1.0
      %v1143 = vadd.f32 %v1111, 1.0
      %v1144 = vlog2.pop %v1112
      %v1145 = vmul.f32 %v1144, 0.6931472
      %v1146 = vlog2.pop %v1113
      %v1147 = vmul.f32 %v1146, 0.6931472
      %v1148 = vlog2.pop %v1114
      %v1149 = vmul.f32 %v1148, 0.6931472
      %v1150 = vlog2.pop %v1115
      %v1151 = vmul.f32 %v1150, 0.6931472
      %v1152 = vlog2.pop %v1116
      %v1153 = vmul.f32 %v1152, 0.6931472
      %v1154 = vlog2.pop %v1117
      %v1155 = vmul.f32 %v1154, 0.6931472
      %v1156 = vlog2.pop %v1118
      %v1157 = vmul.f32 %v1156, 0.6931472
      %v1158 = vlog2.pop %v1119
      %v1159 = vmul.f32 %v1158, 0.6931472
      %v1160 = vlog2.pop %v1120
      %v1161 = vmul.f32 %v1160, 0.6931472
      %v1162 = vlog2.pop %v1121
      %v1163 = vmul.f32 %v1162, 0.6931472
      %v1164 = vlog2.pop %v1122
      %v1165 = vmul.f32 %v1164, 0.6931472
      %v1166 = vlog2.pop %v1123
      %v1167 = vmul.f32 %v1166, 0.6931472
      %v1168 = vlog2.pop %v1124
      %v1169 = vmul.f32 %v1168, 0.6931472
      %v1170 = vlog2.pop %v1125
      %v1171 = vmul.f32 %v1170, 0.6931472
      %v1172 = vlog2.pop %v1126
      %v1173 = vmul.f32 %v1172, 0.6931472
      %v1174 = vlog2.pop %v1127
      %v1175 = vmul.f32 %v1174, 0.6931472
      %v1176 = vlog2.pop %v1128
      %v1177 = vmul.f32 %v1176, 0.6931472
      %v1178 = vlog2.pop %v1129
      %v1179 = vmul.f32 %v1178, 0.6931472
      %v1180 = vlog2.pop %v1130
      %v1181 = vmul.f32 %v1180, 0.6931472
      %v1182 = vlog2.pop %v1131
      %v1183 = vmul.f32 %v1182, 0.6931472
      %v1184 = vlog2.pop %v1132
      %v1185 = vmul.f32 %v1184, 0.6931472
      %v1186 = vlog2.pop %v1133
      %v1187 = vmul.f32 %v1186, 0.6931472
      %v1188 = vlog2.pop %v1134
      %v1189 = vmul.f32 %v1188, 0.6931472
      %v1190 = vlog2.pop %v1135
      %v1191 = vmul.f32 %v1190, 0.6931472
      %v1192 = vlog2.pop %v1136
      %v1193 = vmul.f32 %v1192, 0.6931472
      %v1194 = vlog2.pop %v1137
      %v1195 = vmul.f32 %v1194, 0.6931472
      %v1196 = vlog2.pop %v1138
      %v1197 = vmul.f32 %v1196, 0.6931472
      %v1198 = vlog2.pop %v1139
      %v1199 = vmul.f32 %v1198, 0.6931472
      %v1200 = vlog2.pop %v1140
      %v1201 = vmul.f32 %v1200, 0.6931472
      %v1202 = vlog2.pop %v1141
      %v1203 = vmul.f32 %v1202, 0.6931472
      %v1204 = vlog2.pop %v1142
      %v1205 = vmul.f32 %v1204, 0.6931472
      %v1206 = vlog2.pop %v1143
      %v1207 = vmul.f32 %v1206, 0.6931472
      %v1208 = vadd.f32 %v952, %v1145
      %v1209 = vadd.f32 %v953, %v1147
      %v1210 = vadd.f32 %v954, %v1149
      %v1211 = vadd.f32 %v955, %v1151
      %v1212 = vadd.f32 %v956, %v1153
      %v1213 = vadd.f32 %v957, %v1155
      %v1214 = vadd.f32 %v958, %v1157
      %v1215 = vadd.f32 %v959, %v1159
      %v1216 = vadd.f32 %v960, %v1161
      %v1217 = vadd.f32 %v961, %v1163
      %v1218 = vadd.f32 %v962, %v1165
      %v1219 = vadd.f32 %v963, %v1167
      %v1220 = vadd.f32 %v964, %v1169
      %v1221 = vadd.f32 %v965, %v1171
      %v1222 = vadd.f32 %v966, %v1173
      %v1223 = vadd.f32 %v967, %v1175
      %v1224 = vadd.f32 %v968, %v1177
      %v1225 = vadd.f32 %v969, %v1179
      %v1226 = vadd.f32 %v970, %v1181
      %v1227 = vadd.f32 %v971, %v1183
      %v1228 = vadd.f32 %v972, %v1185
      %v1229 = vadd.f32 %v973, %v1187
      %v1230 = vadd.f32 %v974, %v1189
      %v1231 = vadd.f32 %v975, %v1191
      %v1232 = vadd.f32 %v976, %v1193
      %v1233 = vadd.f32 %v977, %v1195
      %v1234 = vadd.f32 %v978, %v1197
      %v1235 = vadd.f32 %v979, %v1199
      %v1236 = vadd.f32 %v980, %v1201
      %v1237 = vadd.f32 %v981, %v1203
      %v1238 = vadd.f32 %v982, %v1205
      %v1239 = vadd.f32 %v983, %v1207
      %v1240 = vpack.c.bf16 %v1210, %v1208
      %v1241 = vpack.c.bf16 %v1211, %v1209
      %v1242 = vpack.c.bf16 %v1214, %v1212
      %v1243 = vpack.c.bf16 %v1215, %v1213
      %v1244 = vpack.c.bf16 %v1218, %v1216
      %v1245 = vpack.c.bf16 %v1219, %v1217
      %v1246 = vpack.c.bf16 %v1222, %v1220
      %v1247 = vpack.c.bf16 %v1223, %v1221
      %v1248 = vpack.c.bf16 %v1226, %v1224
      %v1249 = vpack.c.bf16 %v1227, %v1225
      %v1250 = vpack.c.bf16 %v1230, %v1228
      %v1251 = vpack.c.bf16 %v1231, %v1229
      %v1252 = vpack.c.bf16 %v1234, %v1232
      %v1253 = vpack.c.bf16 %v1235, %v1233
      %v1254 = vpack.c.bf16 %v1238, %v1236
      %v1255 = vpack.c.bf16 %v1239, %v1237
      %v1256 = vld [vmem:[%s4] sm:$0xf]
      %v1257 = vld [vmem:[%s4 + $0x4] sm:$0xf]
      %v1258 = vld [vmem:[%s4 + $0x8] sm:$0xf]
      %v1259 = vld [vmem:[%s4 + $0xc] sm:$0xf]
      %v1260 = vld [vmem:[%s4 + $0x10] sm:$0xf]
      %v1261 = vld [vmem:[%s4 + $0x14] sm:$0xf]
      %v1262 = vld [vmem:[%s4 + $0x18] sm:$0xf]
      %v1263 = vld [vmem:[%s4 + $0x1c] sm:$0xf]
      %v1264 = vld [vmem:[%s4 + $0x20] sm:$0xf]
      %v1265 = vld [vmem:[%s4 + $0x24] sm:$0xf]
      %v1266 = vld [vmem:[%s4 + $0x28] sm:$0xf]
      %v1267 = vld [vmem:[%s4 + $0x2c] sm:$0xf]
      %v1268 = vld [vmem:[%s4 + $0x30] sm:$0xf]
      %v1269 = vld [vmem:[%s4 + $0x34] sm:$0xf]
      %v1270 = vld [vmem:[%s4 + $0x38] sm:$0xf]
      %v1271 = vld [vmem:[%s4 + $0x3c] sm:$0xf]
      %v1272 = vld [vmem:[%s4 + $0x40] sm:$0xf]
      %v1273 = vld [vmem:[%s4 + $0x44] sm:$0xf]
      %v1274 = vld [vmem:[%s4 + $0x48] sm:$0xf]
      %v1275 = vld [vmem:[%s4 + $0x4c] sm:$0xf]
      %v1276 = vld [vmem:[%s4 + $0x50] sm:$0xf]
      %v1277 = vld [vmem:[%s4 + $0x54] sm:$0xf]
      %v1278 = vld [vmem:[%s4 + $0x58] sm:$0xf]
      %v1279 = vld [vmem:[%s4 + $0x5c] sm:$0xf]
      %v1280 = vld [vmem:[%s4 + $0x60] sm:$0xf]
      %v1281 = vld [vmem:[%s5] sm:$0x1]
      %v1283 = vperm.slane %v1281, 0
      %v1310 = vunpack.c.l.b16 %v1256
      %v1311 = vunpack.c.l.b16 %v1257
      %v1312 = vunpack.c.l.b16 %v1258
      %v1313 = vunpack.c.l.b16 %v1259
      %v1314 = vunpack.c.l.b16 %v1260
      %v1315 = vunpack.c.l.b16 %v1261
      %v1316 = vunpack.c.l.b16 %v1262
      %v1317 = vunpack.c.l.b16 %v1263
      %v1318 = vunpack.c.l.b16 %v1264
      %v1319 = vunpack.c.l.b16 %v1265
      %v1320 = vunpack.c.l.b16 %v1266
      %v1321 = vunpack.c.l.b16 %v1267
      %v1322 = vunpack.c.l.b16 %v1268
      %v1323 = vunpack.c.l.b16 %v1269
      %v1324 = vunpack.c.l.b16 %v1270
      %v1325 = vunpack.c.l.b16 %v1271
      %v1326 = vunpack.c.l.b16 %v1272
      %v1327 = vunpack.c.l.b16 %v1273
      %v1328 = vunpack.c.l.b16 %v1274
      %v1329 = vunpack.c.l.b16 %v1275
      %v1330 = vunpack.c.l.b16 %v1276
      %v1331 = vunpack.c.l.b16 %v1277
      %v1332 = vunpack.c.l.b16 %v1278
      %v1333 = vunpack.c.l.b16 %v1279
      %v1334 = vunpack.c.l.b16 %v1280
      %v1335 = vpack.c.b16 %v1311, %v1310
      %v1336 = vpack.c.b16 %v1313, %v1312
      %v1337 = vpack.c.b16 %v1315, %v1314
      %v1338 = vpack.c.b16 %v1317, %v1316
      %v1339 = vpack.c.b16 %v1319, %v1318
      %v1340 = vpack.c.b16 %v1321, %v1320
      %v1341 = vpack.c.b16 %v1323, %v1322
      %v1342 = vpack.c.b16 %v1325, %v1324
      %v1343 = vpack.c.b16 %v1327, %v1326
      %v1344 = vpack.c.b16 %v1329, %v1328
      %v1345 = vpack.c.b16 %v1331, %v1330
      %v1346 = vpack.c.b16 %v1333, %v1332
      %v1347 = vpack.c.b16 %v1334, %v1334
      %vm1360 = vcmask 588800
      %v1362 = vsel %vm1360, %v1241, 0
      %v1365 = vsel %vm1360, %v1243, 0
      %v1368 = vsel %vm1360, %v1245, 0
      %v1371 = vsel %vm1360, %v1247, 0
      %v1374 = vsel %vm1360, %v1249, 0
      %v1377 = vsel %vm1360, %v1251, 0
      %v1380 = vsel %vm1360, %v1253, 0
      %v1383 = vsel %vm1360, %v1255, 0
      %vm1385 = vcmask 1043456
      %v1387 = vsel %vm1385, %v1347, 0
      %1389 = vmatpush.bf16.msra.mxu0 %v1342
      %1390 = vmatpush.bf16.msra.mxu0 %v1341
      %1391 = vmatpush.bf16.msra.mxu0 %v1340
      %1392 = vmatpush.bf16.msra.mxu0 %v1339
      %1393 = vmatpush.bf16.msra.mxu0 %v1338
      %1394 = vmatpush.bf16.msra.mxu0 %v1337
      %1395 = vmatpush.bf16.msra.mxu0 %v1336
      %1396 = vmatpush.bf16.msra.mxu0 %v1335
      %1397 = vmatmul.bf16.gmra.mxu0 %v1240
      %v1398 = vpop.f32.mrf.mxu0
      %v1399 = vadd.f32 %v1283, %v1398
      %v1400 = vpop.f32.mrf.mxu0
      %v1401 = vadd.f32 %v1283, %v1400
      %1402 = vmatmul.bf16.gmra.mxu0 %v1242
      %v1403 = vpop.f32.mrf.mxu0
      %v1404 = vadd.f32 %v1283, %v1403
      %v1405 = vpop.f32.mrf.mxu0
      %v1406 = vadd.f32 %v1283, %v1405
      %1407 = vmatmul.bf16.gmra.mxu0 %v1244
      %v1408 = vpop.f32.mrf.mxu0
      %v1409 = vadd.f32 %v1283, %v1408
      %v1410 = vpop.f32.mrf.mxu0
      %v1411 = vadd.f32 %v1283, %v1410
      %1412 = vmatmul.bf16.gmra.mxu0 %v1246
      %v1413 = vpop.f32.mrf.mxu0
      %v1414 = vadd.f32 %v1283, %v1413
      %v1415 = vpop.f32.mrf.mxu0
      %v1416 = vadd.f32 %v1283, %v1415
      %1417 = vmatmul.bf16.gmra.mxu0 %v1248
      %v1418 = vpop.f32.mrf.mxu0
      %v1419 = vadd.f32 %v1283, %v1418
      %v1420 = vpop.f32.mrf.mxu0
      %v1421 = vadd.f32 %v1283, %v1420
      %1422 = vmatmul.bf16.gmra.mxu0 %v1250
      %v1423 = vpop.f32.mrf.mxu0
      %v1424 = vadd.f32 %v1283, %v1423
      %v1425 = vpop.f32.mrf.mxu0
      %v1426 = vadd.f32 %v1283, %v1425
      %1427 = vmatmul.bf16.gmra.mxu0 %v1252
      %v1428 = vpop.f32.mrf.mxu0
      %v1429 = vadd.f32 %v1283, %v1428
      %v1430 = vpop.f32.mrf.mxu0
      %v1431 = vadd.f32 %v1283, %v1430
      %1432 = vmatmul.bf16.gmra.mxu0 %v1254
      %v1433 = vpop.f32.mrf.mxu0
      %v1434 = vadd.f32 %v1283, %v1433
      %v1435 = vpop.f32.mrf.mxu0
      %v1436 = vadd.f32 %v1283, %v1435
      %1437 = vdwg.mxu0
      %1438 = vmatpush.bf16.msra.mxu0 0
      %1439 = vmatpush.bf16.msra.mxu0 0
      %1440 = vmatpush.bf16.msra.mxu0 0
      %1441 = vmatpush.bf16.msra.mxu0 %v1387
      %1442 = vmatpush.bf16.msra.mxu0 %v1346
      %1443 = vmatpush.bf16.msra.mxu0 %v1345
      %1444 = vmatpush.bf16.msra.mxu0 %v1344
      %1445 = vmatpush.bf16.msra.mxu0 %v1343
      %1446 = vmatmul.bf16.gmra.mxu0 %v1362
      %v1447 = vpop.f32.mrf.mxu0
      %v1448 = vadd.f32 %v1399, %v1447
      %v1449 = vpop.f32.mrf.mxu0
      %v1450 = vadd.f32 %v1401, %v1449
      %1451 = vmatmul.bf16.gmra.mxu0 %v1365
      %v1452 = vpop.f32.mrf.mxu0
      %v1453 = vadd.f32 %v1404, %v1452
      %v1454 = vpop.f32.mrf.mxu0
      %v1455 = vadd.f32 %v1406, %v1454
      %1456 = vmatmul.bf16.gmra.mxu0 %v1368
      %v1457 = vpop.f32.mrf.mxu0
      %v1458 = vadd.f32 %v1409, %v1457
      %v1459 = vpop.f32.mrf.mxu0
      %v1460 = vadd.f32 %v1411, %v1459
      %1461 = vmatmul.bf16.gmra.mxu0 %v1371
      %v1462 = vpop.f32.mrf.mxu0
      %v1463 = vadd.f32 %v1414, %v1462
      %v1464 = vpop.f32.mrf.mxu0
      %v1465 = vadd.f32 %v1416, %v1464
      %1466 = vmatmul.bf16.gmra.mxu0 %v1374
      %v1467 = vpop.f32.mrf.mxu0
      %v1468 = vadd.f32 %v1419, %v1467
      %v1469 = vpop.f32.mrf.mxu0
      %v1470 = vadd.f32 %v1421, %v1469
      %1471 = vmatmul.bf16.gmra.mxu0 %v1377
      %v1472 = vpop.f32.mrf.mxu0
      %v1473 = vadd.f32 %v1424, %v1472
      %v1474 = vpop.f32.mrf.mxu0
      %v1475 = vadd.f32 %v1426, %v1474
      %1476 = vmatmul.bf16.gmra.mxu0 %v1380
      %v1477 = vpop.f32.mrf.mxu0
      %v1478 = vadd.f32 %v1429, %v1477
      %v1479 = vpop.f32.mrf.mxu0
      %v1480 = vadd.f32 %v1431, %v1479
      %1481 = vmatmul.bf16.gmra.mxu0 %v1383
      %v1482 = vpop.f32.mrf.mxu0
      %v1483 = vadd.f32 %v1434, %v1482
      %v1484 = vpop.f32.mrf.mxu0
      %v1485 = vadd.f32 %v1436, %v1484
      %1486 = vdwg.mxu0
      %v1487 = vmax.f32 %v1448, 0.0
      %v1488 = vmax.f32 %v1450, 0.0
      %v1489 = vmax.f32 %v1453, 0.0
      %v1490 = vmax.f32 %v1455, 0.0
      %v1491 = vmax.f32 %v1458, 0.0
      %v1492 = vmax.f32 %v1460, 0.0
      %v1493 = vmax.f32 %v1463, 0.0
      %v1494 = vmax.f32 %v1465, 0.0
      %v1495 = vmax.f32 %v1468, 0.0
      %v1496 = vmax.f32 %v1470, 0.0
      %v1497 = vmax.f32 %v1473, 0.0
      %v1498 = vmax.f32 %v1475, 0.0
      %v1499 = vmax.f32 %v1478, 0.0
      %v1500 = vmax.f32 %v1480, 0.0
      %v1501 = vmax.f32 %v1483, 0.0
      %v1502 = vmax.f32 %v1485, 0.0
      %v1503 = vand.u32 2147483647, %v1448
      %v1504 = vand.u32 2147483647, %v1450
      %v1505 = vand.u32 2147483647, %v1453
      %v1506 = vand.u32 2147483647, %v1455
      %v1507 = vand.u32 2147483647, %v1458
      %v1508 = vand.u32 2147483647, %v1460
      %v1509 = vand.u32 2147483647, %v1463
      %v1510 = vand.u32 2147483647, %v1465
      %v1511 = vand.u32 2147483647, %v1468
      %v1512 = vand.u32 2147483647, %v1470
      %v1513 = vand.u32 2147483647, %v1473
      %v1514 = vand.u32 2147483647, %v1475
      %v1515 = vand.u32 2147483647, %v1478
      %v1516 = vand.u32 2147483647, %v1480
      %v1517 = vand.u32 2147483647, %v1483
      %v1518 = vand.u32 2147483647, %v1485
      %v1519 = vsub.f32 0.0, %v1503
      %v1520 = vsub.f32 0.0, %v1504
      %v1521 = vsub.f32 0.0, %v1505
      %v1522 = vsub.f32 0.0, %v1506
      %v1523 = vsub.f32 0.0, %v1507
      %v1524 = vsub.f32 0.0, %v1508
      %v1525 = vsub.f32 0.0, %v1509
      %v1526 = vsub.f32 0.0, %v1510
      %v1527 = vsub.f32 0.0, %v1511
      %v1528 = vsub.f32 0.0, %v1512
      %v1529 = vsub.f32 0.0, %v1513
      %v1530 = vsub.f32 0.0, %v1514
      %v1531 = vsub.f32 0.0, %v1515
      %v1532 = vsub.f32 0.0, %v1516
      %v1533 = vsub.f32 0.0, %v1517
      %v1534 = vsub.f32 0.0, %v1518
      %v1535 = vmul.f32 %v1519, 1.442695
      %v1536 = vpow.pop %v1535
      %v1537 = vmul.f32 %v1520, 1.442695
      %v1538 = vpow.pop %v1537
      %v1539 = vmul.f32 %v1521, 1.442695
      %v1540 = vpow.pop %v1539
      %v1541 = vmul.f32 %v1522, 1.442695
      %v1542 = vpow.pop %v1541
      %v1543 = vmul.f32 %v1523, 1.442695
      %v1544 = vpow.pop %v1543
      %v1545 = vmul.f32 %v1524, 1.442695
      %v1546 = vpow.pop %v1545
      %v1547 = vmul.f32 %v1525, 1.442695
      %v1548 = vpow.pop %v1547
      %v1549 = vmul.f32 %v1526, 1.442695
      %v1550 = vpow.pop %v1549
      %v1551 = vmul.f32 %v1527, 1.442695
      %v1552 = vpow.pop %v1551
      %v1553 = vmul.f32 %v1528, 1.442695
      %v1554 = vpow.pop %v1553
      %v1555 = vmul.f32 %v1529, 1.442695
      %v1556 = vpow.pop %v1555
      %v1557 = vmul.f32 %v1530, 1.442695
      %v1558 = vpow.pop %v1557
      %v1559 = vmul.f32 %v1531, 1.442695
      %v1560 = vpow.pop %v1559
      %v1561 = vmul.f32 %v1532, 1.442695
      %v1562 = vpow.pop %v1561
      %v1563 = vmul.f32 %v1533, 1.442695
      %v1564 = vpow.pop %v1563
      %v1565 = vmul.f32 %v1534, 1.442695
      %v1566 = vpow.pop %v1565
      %v1567 = vadd.f32 %v1536, 1.0
      %v1568 = vadd.f32 %v1538, 1.0
      %v1569 = vadd.f32 %v1540, 1.0
      %v1570 = vadd.f32 %v1542, 1.0
      %v1571 = vadd.f32 %v1544, 1.0
      %v1572 = vadd.f32 %v1546, 1.0
      %v1573 = vadd.f32 %v1548, 1.0
      %v1574 = vadd.f32 %v1550, 1.0
      %v1575 = vadd.f32 %v1552, 1.0
      %v1576 = vadd.f32 %v1554, 1.0
      %v1577 = vadd.f32 %v1556, 1.0
      %v1578 = vadd.f32 %v1558, 1.0
      %v1579 = vadd.f32 %v1560, 1.0
      %v1580 = vadd.f32 %v1562, 1.0
      %v1581 = vadd.f32 %v1564, 1.0
      %v1582 = vadd.f32 %v1566, 1.0
      %v1583 = vlog2.pop %v1567
      %v1584 = vmul.f32 %v1583, 0.6931472
      %v1585 = vlog2.pop %v1568
      %v1586 = vmul.f32 %v1585, 0.6931472
      %v1587 = vlog2.pop %v1569
      %v1588 = vmul.f32 %v1587, 0.6931472
      %v1589 = vlog2.pop %v1570
      %v1590 = vmul.f32 %v1589, 0.6931472
      %v1591 = vlog2.pop %v1571
      %v1592 = vmul.f32 %v1591, 0.6931472
      %v1593 = vlog2.pop %v1572
      %v1594 = vmul.f32 %v1593, 0.6931472
      %v1595 = vlog2.pop %v1573
      %v1596 = vmul.f32 %v1595, 0.6931472
      %v1597 = vlog2.pop %v1574
      %v1598 = vmul.f32 %v1597, 0.6931472
      %v1599 = vlog2.pop %v1575
      %v1600 = vmul.f32 %v1599, 0.6931472
      %v1601 = vlog2.pop %v1576
      %v1602 = vmul.f32 %v1601, 0.6931472
      %v1603 = vlog2.pop %v1577
      %v1604 = vmul.f32 %v1603, 0.6931472
      %v1605 = vlog2.pop %v1578
      %v1606 = vmul.f32 %v1605, 0.6931472
      %v1607 = vlog2.pop %v1579
      %v1608 = vmul.f32 %v1607, 0.6931472
      %v1609 = vlog2.pop %v1580
      %v1610 = vmul.f32 %v1609, 0.6931472
      %v1611 = vlog2.pop %v1581
      %v1612 = vmul.f32 %v1611, 0.6931472
      %v1613 = vlog2.pop %v1582
      %v1614 = vmul.f32 %v1613, 0.6931472
      %v1615 = vadd.f32 %v1487, %v1584
      %v1616 = vadd.f32 %v1488, %v1586
      %v1617 = vadd.f32 %v1489, %v1588
      %v1618 = vadd.f32 %v1490, %v1590
      %v1619 = vadd.f32 %v1491, %v1592
      %v1620 = vadd.f32 %v1492, %v1594
      %v1621 = vadd.f32 %v1493, %v1596
      %v1622 = vadd.f32 %v1494, %v1598
      %v1623 = vadd.f32 %v1495, %v1600
      %v1624 = vadd.f32 %v1496, %v1602
      %v1625 = vadd.f32 %v1497, %v1604
      %v1626 = vadd.f32 %v1498, %v1606
      %v1627 = vadd.f32 %v1499, %v1608
      %v1628 = vadd.f32 %v1500, %v1610
      %v1629 = vadd.f32 %v1501, %v1612
      %v1630 = vadd.f32 %v1502, %v1614
      %v1631 = vpack.c.bf16 %v1616, %v1615
      %v1632 = vpack.c.bf16 %v1618, %v1617
      %v1633 = vpack.c.bf16 %v1620, %v1619
      %v1634 = vpack.c.bf16 %v1622, %v1621
      %v1635 = vpack.c.bf16 %v1624, %v1623
      %v1636 = vpack.c.bf16 %v1626, %v1625
      %v1637 = vpack.c.bf16 %v1628, %v1627
      %v1638 = vpack.c.bf16 %v1630, %v1629
      %v1639 = vld [vmem:[%s6] sm:$0xf]
      %v1640 = vld [vmem:[%s6 + $0x4] sm:$0xf]
      %v1641 = vld [vmem:[%s6 + $0x8] sm:$0xf]
      %v1642 = vld [vmem:[%s6 + $0xc] sm:$0xf]
      %v1643 = vld [vmem:[%s6 + $0x10] sm:$0xf]
      %v1644 = vld [vmem:[%s6 + $0x14] sm:$0xf]
      %v1645 = vld [vmem:[%s6 + $0x18] sm:$0xf]
      %v1646 = vld [vmem:[%s6 + $0x1c] sm:$0xf]
      %v1647 = vld [vmem:[%s6 + $0x20] sm:$0xf]
      %v1648 = vld [vmem:[%s6 + $0x24] sm:$0xf]
      %v1649 = vld [vmem:[%s6 + $0x28] sm:$0xf]
      %v1650 = vld [vmem:[%s6 + $0x2c] sm:$0xf]
      %v1651 = vld [vmem:[%s6 + $0x30] sm:$0x3]
      %v1652 = vld [vmem:[%s7] sm:$0x1]
      %v1654 = vperm.slane %v1652, 0
      %v1669 = vunpack.c.l.b16 %v1639
      %v1670 = vunpack.c.l.b16 %v1640
      %v1671 = vunpack.c.l.b16 %v1641
      %v1672 = vunpack.c.l.b16 %v1642
      %v1673 = vunpack.c.l.b16 %v1643
      %v1674 = vunpack.c.l.b16 %v1644
      %v1675 = vunpack.c.l.b16 %v1645
      %v1676 = vunpack.c.l.b16 %v1646
      %v1677 = vunpack.c.l.b16 %v1647
      %v1678 = vunpack.c.l.b16 %v1648
      %v1679 = vunpack.c.l.b16 %v1649
      %v1680 = vunpack.c.l.b16 %v1650
      %v1681 = vunpack.c.l.b16 %v1651
      %v1682 = vpack.c.b16 %v1670, %v1669
      %v1683 = vpack.c.b16 %v1672, %v1671
      %v1684 = vpack.c.b16 %v1674, %v1673
      %v1685 = vpack.c.b16 %v1676, %v1675
      %v1686 = vpack.c.b16 %v1678, %v1677
      %v1687 = vpack.c.b16 %v1680, %v1679
      %v1688 = vpack.c.b16 %v1681, %v1681
      %vm1695 = vcmask 818176
      %v1697 = vsel %vm1695, %v1631, 0
      %v1700 = vsel %vm1695, %v1632, 0
      %v1703 = vsel %vm1695, %v1633, 0
      %v1706 = vsel %vm1695, %v1634, 0
      %v1709 = vsel %vm1695, %v1635, 0
      %v1712 = vsel %vm1695, %v1636, 0
      %v1715 = vsel %vm1695, %v1637, 0
      %v1718 = vsel %vm1695, %v1638, 0
      %vm1720 = vcmask 1041408
      %v1722 = vsel %vm1720, %v1688, 0
      %1724 = vmatpush.bf16.msra.mxu0 0
      %1725 = vmatpush.bf16.msra.mxu0 %v1722
      %1726 = vmatpush.bf16.msra.mxu0 %v1687
      %1727 = vmatpush.bf16.msra.mxu0 %v1686
      %1728 = vmatpush.bf16.msra.mxu0 %v1685
      %1729 = vmatpush.bf16.msra.mxu0 %v1684
      %1730 = vmatpush.bf16.msra.mxu0 %v1683
      %1731 = vmatpush.bf16.msra.mxu0 %v1682
      %1732 = vmatmul.bf16.gmra.mxu0 %v1697
      %v1733 = vpop.f32.mrf.mxu0
      %v1734 = vadd.f32 %v1654, %v1733
      %v1735 = vpop.f32.mrf.mxu0
      %v1736 = vadd.f32 %v1654, %v1735
      %1737 = vmatmul.bf16.gmra.mxu0 %v1700
      %v1738 = vpop.f32.mrf.mxu0
      %v1739 = vadd.f32 %v1654, %v1738
      %v1740 = vpop.f32.mrf.mxu0
      %v1741 = vadd.f32 %v1654, %v1740
      %1742 = vmatmul.bf16.gmra.mxu0 %v1703
      %v1743 = vpop.f32.mrf.mxu0
      %v1744 = vadd.f32 %v1654, %v1743
      %v1745 = vpop.f32.mrf.mxu0
      %v1746 = vadd.f32 %v1654, %v1745
      %1747 = vmatmul.bf16.gmra.mxu0 %v1706
      %v1748 = vpop.f32.mrf.mxu0
      %v1749 = vadd.f32 %v1654, %v1748
      %v1750 = vpop.f32.mrf.mxu0
      %v1751 = vadd.f32 %v1654, %v1750
      %1752 = vmatmul.bf16.gmra.mxu0 %v1709
      %v1753 = vpop.f32.mrf.mxu0
      %v1754 = vadd.f32 %v1654, %v1753
      %v1755 = vpop.f32.mrf.mxu0
      %v1756 = vadd.f32 %v1654, %v1755
      %1757 = vmatmul.bf16.gmra.mxu0 %v1712
      %v1758 = vpop.f32.mrf.mxu0
      %v1759 = vadd.f32 %v1654, %v1758
      %v1760 = vpop.f32.mrf.mxu0
      %v1761 = vadd.f32 %v1654, %v1760
      %1762 = vmatmul.bf16.gmra.mxu0 %v1715
      %v1763 = vpop.f32.mrf.mxu0
      %v1764 = vadd.f32 %v1654, %v1763
      %v1765 = vpop.f32.mrf.mxu0
      %v1766 = vadd.f32 %v1654, %v1765
      %1767 = vmatmul.bf16.gmra.mxu0 %v1718
      %v1768 = vpop.f32.mrf.mxu0
      %v1769 = vadd.f32 %v1654, %v1768
      %v1770 = vpop.f32.mrf.mxu0
      %v1771 = vadd.f32 %v1654, %v1770
      %1772 = vdwg.mxu0
      %v1773 = vmul.f32 %v1734, 1.442695
      %v1774 = vpow.pop %v1773
      %v1775 = vmul.f32 %v1736, 1.442695
      %v1776 = vpow.pop %v1775
      %v1777 = vmul.f32 %v1739, 1.442695
      %v1778 = vpow.pop %v1777
      %v1779 = vmul.f32 %v1741, 1.442695
      %v1780 = vpow.pop %v1779
      %v1781 = vmul.f32 %v1744, 1.442695
      %v1782 = vpow.pop %v1781
      %v1783 = vmul.f32 %v1746, 1.442695
      %v1784 = vpow.pop %v1783
      %v1785 = vmul.f32 %v1749, 1.442695
      %v1786 = vpow.pop %v1785
      %v1787 = vmul.f32 %v1751, 1.442695
      %v1788 = vpow.pop %v1787
      %v1789 = vmul.f32 %v1754, 1.442695
      %v1790 = vpow.pop %v1789
      %v1791 = vmul.f32 %v1756, 1.442695
      %v1792 = vpow.pop %v1791
      %v1793 = vmul.f32 %v1759, 1.442695
      %v1794 = vpow.pop %v1793
      %v1795 = vmul.f32 %v1761, 1.442695
      %v1796 = vpow.pop %v1795
      %v1797 = vmul.f32 %v1764, 1.442695
      %v1798 = vpow.pop %v1797
      %v1799 = vmul.f32 %v1766, 1.442695
      %v1800 = vpow.pop %v1799
      %v1801 = vmul.f32 %v1769, 1.442695
      %v1802 = vpow.pop %v1801
      %v1803 = vmul.f32 %v1771, 1.442695
      %v1804 = vpow.pop %v1803
      %1821 = vrot.lane.b32.xlu0 %v510, 5
      %v1822 = vpop.permute.xlu0 %1821
      %1823 = vrot.lane.b32.xlu0 %v511, 5
      %v1824 = vpop.permute.xlu0 %1823
      %1825 = vrot.lane.b32.xlu0 %v512, 5
      %v1826 = vpop.permute.xlu0 %1825
      %1827 = vrot.lane.b32.xlu0 %v513, 5
      %v1828 = vpop.permute.xlu0 %1827
      %1829 = vrot.lane.b32.xlu0 %v514, 5
      %v1830 = vpop.permute.xlu0 %1829
      %1831 = vrot.lane.b32.xlu0 %v515, 5
      %v1832 = vpop.permute.xlu0 %1831
      %1833 = vrot.lane.b32.xlu0 %v516, 5
      %v1834 = vpop.permute.xlu0 %1833
      %1835 = vrot.lane.b32.xlu0 %v517, 5
      %v1836 = vpop.permute.xlu0 %1835
      %1837 = vrot.lane.b32.xlu0 %v518, 5
      %v1838 = vpop.permute.xlu0 %1837
      %1839 = vrot.lane.b32.xlu0 %v519, 5
      %v1840 = vpop.permute.xlu0 %1839
      %1841 = vrot.lane.b32.xlu0 %v520, 5
      %v1842 = vpop.permute.xlu0 %1841
      %1843 = vrot.lane.b32.xlu0 %v521, 5
      %v1844 = vpop.permute.xlu0 %1843
      %1845 = vrot.lane.b32.xlu0 %v522, 5
      %v1846 = vpop.permute.xlu0 %1845
      %1847 = vrot.lane.b32.xlu0 %v523, 5
      %v1848 = vpop.permute.xlu0 %1847
      %1849 = vrot.lane.b32.xlu0 %v524, 5
      %v1850 = vpop.permute.xlu0 %1849
      %1851 = vrot.lane.b32.xlu0 %v525, 5
      %v1852 = vpop.permute.xlu0 %1851
      %v1869 = vmul.f32 %v1774, %v1822
      %v1870 = vmul.f32 %v1776, %v1824
      %v1871 = vmul.f32 %v1778, %v1826
      %v1872 = vmul.f32 %v1780, %v1828
      %v1873 = vmul.f32 %v1782, %v1830
      %v1874 = vmul.f32 %v1784, %v1832
      %v1875 = vmul.f32 %v1786, %v1834
      %v1876 = vmul.f32 %v1788, %v1836
      %v1877 = vmul.f32 %v1790, %v1838
      %v1878 = vmul.f32 %v1792, %v1840
      %v1879 = vmul.f32 %v1794, %v1842
      %v1880 = vmul.f32 %v1796, %v1844
      %v1881 = vmul.f32 %v1798, %v1846
      %v1882 = vmul.f32 %v1800, %v1848
      %v1883 = vmul.f32 %v1802, %v1850
      %v1884 = vmul.f32 %v1804, %v1852
      %1901 = vrot.lane.b32.xlu0 %v1869, 126
      %v1902 = vpop.permute.xlu0 %1901
      %1903 = vrot.lane.b32.xlu0 %v1870, 126
      %v1904 = vpop.permute.xlu0 %1903
      %1905 = vrot.lane.b32.xlu0 %v1871, 126
      %v1906 = vpop.permute.xlu0 %1905
      %1907 = vrot.lane.b32.xlu0 %v1872, 126
      %v1908 = vpop.permute.xlu0 %1907
      %1909 = vrot.lane.b32.xlu0 %v1873, 126
      %v1910 = vpop.permute.xlu0 %1909
      %1911 = vrot.lane.b32.xlu0 %v1874, 126
      %v1912 = vpop.permute.xlu0 %1911
      %1913 = vrot.lane.b32.xlu0 %v1875, 126
      %v1914 = vpop.permute.xlu0 %1913
      %1915 = vrot.lane.b32.xlu0 %v1876, 126
      %v1916 = vpop.permute.xlu0 %1915
      %1917 = vrot.lane.b32.xlu0 %v1877, 126
      %v1918 = vpop.permute.xlu0 %1917
      %1919 = vrot.lane.b32.xlu0 %v1878, 126
      %v1920 = vpop.permute.xlu0 %1919
      %1921 = vrot.lane.b32.xlu0 %v1879, 126
      %v1922 = vpop.permute.xlu0 %1921
      %1923 = vrot.lane.b32.xlu0 %v1880, 126
      %v1924 = vpop.permute.xlu0 %1923
      %1925 = vrot.lane.b32.xlu0 %v1881, 126
      %v1926 = vpop.permute.xlu0 %1925
      %1927 = vrot.lane.b32.xlu0 %v1882, 126
      %v1928 = vpop.permute.xlu0 %1927
      %1929 = vrot.lane.b32.xlu0 %v1883, 126
      %v1930 = vpop.permute.xlu0 %1929
      %1931 = vrot.lane.b32.xlu0 %v1884, 126
      %v1932 = vpop.permute.xlu0 %1931
      %v1949 = vadd.f32 %v1734, %v1902
      %v1950 = vadd.f32 %v1736, %v1904
      %v1951 = vadd.f32 %v1739, %v1906
      %v1952 = vadd.f32 %v1741, %v1908
      %v1953 = vadd.f32 %v1744, %v1910
      %v1954 = vadd.f32 %v1746, %v1912
      %v1955 = vadd.f32 %v1749, %v1914
      %v1956 = vadd.f32 %v1751, %v1916
      %v1957 = vadd.f32 %v1754, %v1918
      %v1958 = vadd.f32 %v1756, %v1920
      %v1959 = vadd.f32 %v1759, %v1922
      %v1960 = vadd.f32 %v1761, %v1924
      %v1961 = vadd.f32 %v1764, %v1926
      %v1962 = vadd.f32 %v1766, %v1928
      %v1963 = vadd.f32 %v1769, %v1930
      %v1964 = vadd.f32 %v1771, %v1932
      %v1965 = vld [vmem:[%s8] sm:$0x1]
      %1967 = vset.pattern.permute.xlu0 3
      %1968 = vperm.xlu0 %1967, %v1949
      %v1969 = vpop.permute.xlu0 %1968
      %1972 = vset.pattern.permute.xlu0 3
      %1973 = vperm.xlu0 %1972, %v1950
      %v1974 = vpop.permute.xlu0 %1973
      %1977 = vset.pattern.permute.xlu0 3
      %1978 = vperm.xlu0 %1977, %v1951
      %v1979 = vpop.permute.xlu0 %1978
      %1982 = vset.pattern.permute.xlu0 3
      %1983 = vperm.xlu0 %1982, %v1952
      %v1984 = vpop.permute.xlu0 %1983
      %1987 = vset.pattern.permute.xlu0 3
      %1988 = vperm.xlu0 %1987, %v1953
      %v1989 = vpop.permute.xlu0 %1988
      %1992 = vset.pattern.permute.xlu0 3
      %1993 = vperm.xlu0 %1992, %v1954
      %v1994 = vpop.permute.xlu0 %1993
      %1997 = vset.pattern.permute.xlu0 3
      %1998 = vperm.xlu0 %1997, %v1955
      %v1999 = vpop.permute.xlu0 %1998
      %2002 = vset.pattern.permute.xlu0 3
      %2003 = vperm.xlu0 %2002, %v1956
      %v2004 = vpop.permute.xlu0 %2003
      %2007 = vset.pattern.permute.xlu0 3
      %2008 = vperm.xlu0 %2007, %v1957
      %v2009 = vpop.permute.xlu0 %2008
      %2012 = vset.pattern.permute.xlu0 3
      %2013 = vperm.xlu0 %2012, %v1958
      %v2014 = vpop.permute.xlu0 %2013
      %2017 = vset.pattern.permute.xlu0 3
      %2018 = vperm.xlu0 %2017, %v1959
      %v2019 = vpop.permute.xlu0 %2018
      %2022 = vset.pattern.permute.xlu0 3
      %2023 = vperm.xlu0 %2022, %v1960
      %v2024 = vpop.permute.xlu0 %2023
      %2027 = vset.pattern.permute.xlu0 3
      %2028 = vperm.xlu0 %2027, %v1961
      %v2029 = vpop.permute.xlu0 %2028
      %2032 = vset.pattern.permute.xlu0 3
      %2033 = vperm.xlu0 %2032, %v1962
      %v2034 = vpop.permute.xlu0 %2033
      %2037 = vset.pattern.permute.xlu0 3
      %2038 = vperm.xlu0 %2037, %v1963
      %v2039 = vpop.permute.xlu0 %2038
      %2042 = vset.pattern.permute.xlu0 3
      %2043 = vperm.xlu0 %2042, %v1964
      %v2044 = vpop.permute.xlu0 %2043
      %v2046 = vperm.slane %v1965, 0
      %v2047 = vmul.f32 %v1969, %v2046
      %v2048 = vmul.f32 %v1974, %v2046
      %v2049 = vmul.f32 %v1979, %v2046
      %v2050 = vmul.f32 %v1984, %v2046
      %v2051 = vmul.f32 %v1989, %v2046
      %v2052 = vmul.f32 %v1994, %v2046
      %v2053 = vmul.f32 %v1999, %v2046
      %v2054 = vmul.f32 %v2004, %v2046
      %v2055 = vmul.f32 %v2009, %v2046
      %v2056 = vmul.f32 %v2014, %v2046
      %v2057 = vmul.f32 %v2019, %v2046
      %v2058 = vmul.f32 %v2024, %v2046
      %v2059 = vmul.f32 %v2029, %v2046
      %v2060 = vmul.f32 %v2034, %v2046
      %v2061 = vmul.f32 %v2039, %v2046
      %v2062 = vmul.f32 %v2044, %v2046
      %v2063 = vld [vmem:[%s8 + $0x1] sm:$0x1]
      %2064 = vset.pattern.permute.xlu0 4
      %2065 = vperm.xlu0 %2064, %v1949
      %v2066 = vpop.permute.xlu0 %2065
      %2068 = vset.pattern.permute.xlu0 4
      %2069 = vperm.xlu0 %2068, %v1950
      %v2070 = vpop.permute.xlu0 %2069
      %2072 = vset.pattern.permute.xlu0 4
      %2073 = vperm.xlu0 %2072, %v1951
      %v2074 = vpop.permute.xlu0 %2073
      %2076 = vset.pattern.permute.xlu0 4
      %2077 = vperm.xlu0 %2076, %v1952
      %v2078 = vpop.permute.xlu0 %2077
      %2080 = vset.pattern.permute.xlu0 4
      %2081 = vperm.xlu0 %2080, %v1953
      %v2082 = vpop.permute.xlu0 %2081
      %2084 = vset.pattern.permute.xlu0 4
      %2085 = vperm.xlu0 %2084, %v1954
      %v2086 = vpop.permute.xlu0 %2085
      %2088 = vset.pattern.permute.xlu0 4
      %2089 = vperm.xlu0 %2088, %v1955
      %v2090 = vpop.permute.xlu0 %2089
      %2092 = vset.pattern.permute.xlu0 4
      %2093 = vperm.xlu0 %2092, %v1956
      %v2094 = vpop.permute.xlu0 %2093
      %2096 = vset.pattern.permute.xlu0 4
      %2097 = vperm.xlu0 %2096, %v1957
      %v2098 = vpop.permute.xlu0 %2097
      %2100 = vset.pattern.permute.xlu0 4
      %2101 = vperm.xlu0 %2100, %v1958
      %v2102 = vpop.permute.xlu0 %2101
      %2104 = vset.pattern.permute.xlu0 4
      %2105 = vperm.xlu0 %2104, %v1959
      %v2106 = vpop.permute.xlu0 %2105
      %2108 = vset.pattern.permute.xlu0 4
      %2109 = vperm.xlu0 %2108, %v1960
      %v2110 = vpop.permute.xlu0 %2109
      %2112 = vset.pattern.permute.xlu0 4
      %2113 = vperm.xlu0 %2112, %v1961
      %v2114 = vpop.permute.xlu0 %2113
      %2116 = vset.pattern.permute.xlu0 4
      %2117 = vperm.xlu0 %2116, %v1962
      %v2118 = vpop.permute.xlu0 %2117
      %2120 = vset.pattern.permute.xlu0 4
      %2121 = vperm.xlu0 %2120, %v1963
      %v2122 = vpop.permute.xlu0 %2121
      %2124 = vset.pattern.permute.xlu0 4
      %2125 = vperm.xlu0 %2124, %v1964
      %v2126 = vpop.permute.xlu0 %2125
      %v2128 = vperm.slane %v2063, 0
      %v2129 = vmul.f32 %v2066, %v2128
      %v2130 = vmul.f32 %v2070, %v2128
      %v2131 = vmul.f32 %v2074, %v2128
      %v2132 = vmul.f32 %v2078, %v2128
      %v2133 = vmul.f32 %v2082, %v2128
      %v2134 = vmul.f32 %v2086, %v2128
      %v2135 = vmul.f32 %v2090, %v2128
      %v2136 = vmul.f32 %v2094, %v2128
      %v2137 = vmul.f32 %v2098, %v2128
      %v2138 = vmul.f32 %v2102, %v2128
      %v2139 = vmul.f32 %v2106, %v2128
      %v2140 = vmul.f32 %v2110, %v2128
      %v2141 = vmul.f32 %v2114, %v2128
      %v2142 = vmul.f32 %v2118, %v2128
      %v2143 = vmul.f32 %v2122, %v2128
      %v2144 = vmul.f32 %v2126, %v2128
      %v2145 = vadd.f32 %v2047, %v2129
      %v2146 = vadd.f32 %v2048, %v2130
      %v2147 = vadd.f32 %v2049, %v2131
      %v2148 = vadd.f32 %v2050, %v2132
      %v2149 = vadd.f32 %v2051, %v2133
      %v2150 = vadd.f32 %v2052, %v2134
      %v2151 = vadd.f32 %v2053, %v2135
      %v2152 = vadd.f32 %v2054, %v2136
      %v2153 = vadd.f32 %v2055, %v2137
      %v2154 = vadd.f32 %v2056, %v2138
      %v2155 = vadd.f32 %v2057, %v2139
      %v2156 = vadd.f32 %v2058, %v2140
      %v2157 = vadd.f32 %v2059, %v2141
      %v2158 = vadd.f32 %v2060, %v2142
      %v2159 = vadd.f32 %v2061, %v2143
      %v2160 = vadd.f32 %v2062, %v2144
      %v2161 = vld [vmem:[%s9] sm:$0x1]
      %v2163 = vperm.slane %v2161, 0
      %v2165 = vadd.f32 %v2145, %v2163
      %v2166 = vadd.f32 %v2146, %v2163
      %v2167 = vadd.f32 %v2147, %v2163
      %v2168 = vadd.f32 %v2148, %v2163
      %v2169 = vadd.f32 %v2149, %v2163
      %v2170 = vadd.f32 %v2150, %v2163
      %v2171 = vadd.f32 %v2151, %v2163
      %v2172 = vadd.f32 %v2152, %v2163
      %v2173 = vadd.f32 %v2153, %v2163
      %v2174 = vadd.f32 %v2154, %v2163
      %v2175 = vadd.f32 %v2155, %v2163
      %v2176 = vadd.f32 %v2156, %v2163
      %v2177 = vadd.f32 %v2157, %v2163
      %v2178 = vadd.f32 %v2158, %v2163
      %v2179 = vadd.f32 %v2159, %v2163
      %v2180 = vadd.f32 %v2160, %v2163
      %v2181 = vmax.f32 %v2165, 0.0
      %v2182 = vmax.f32 %v2166, 0.0
      %v2183 = vmax.f32 %v2167, 0.0
      %v2184 = vmax.f32 %v2168, 0.0
      %v2185 = vmax.f32 %v2169, 0.0
      %v2186 = vmax.f32 %v2170, 0.0
      %v2187 = vmax.f32 %v2171, 0.0
      %v2188 = vmax.f32 %v2172, 0.0
      %v2189 = vmax.f32 %v2173, 0.0
      %v2190 = vmax.f32 %v2174, 0.0
      %v2191 = vmax.f32 %v2175, 0.0
      %v2192 = vmax.f32 %v2176, 0.0
      %v2193 = vmax.f32 %v2177, 0.0
      %v2194 = vmax.f32 %v2178, 0.0
      %v2195 = vmax.f32 %v2179, 0.0
      %v2196 = vmax.f32 %v2180, 0.0
      %v2197 = vand.u32 2147483647, %v2165
      %v2198 = vand.u32 2147483647, %v2166
      %v2199 = vand.u32 2147483647, %v2167
      %v2200 = vand.u32 2147483647, %v2168
      %v2201 = vand.u32 2147483647, %v2169
      %v2202 = vand.u32 2147483647, %v2170
      %v2203 = vand.u32 2147483647, %v2171
      %v2204 = vand.u32 2147483647, %v2172
      %v2205 = vand.u32 2147483647, %v2173
      %v2206 = vand.u32 2147483647, %v2174
      %v2207 = vand.u32 2147483647, %v2175
      %v2208 = vand.u32 2147483647, %v2176
      %v2209 = vand.u32 2147483647, %v2177
      %v2210 = vand.u32 2147483647, %v2178
      %v2211 = vand.u32 2147483647, %v2179
      %v2212 = vand.u32 2147483647, %v2180
      %v2213 = vsub.f32 0.0, %v2197
      %v2214 = vsub.f32 0.0, %v2198
      %v2215 = vsub.f32 0.0, %v2199
      %v2216 = vsub.f32 0.0, %v2200
      %v2217 = vsub.f32 0.0, %v2201
      %v2218 = vsub.f32 0.0, %v2202
      %v2219 = vsub.f32 0.0, %v2203
      %v2220 = vsub.f32 0.0, %v2204
      %v2221 = vsub.f32 0.0, %v2205
      %v2222 = vsub.f32 0.0, %v2206
      %v2223 = vsub.f32 0.0, %v2207
      %v2224 = vsub.f32 0.0, %v2208
      %v2225 = vsub.f32 0.0, %v2209
      %v2226 = vsub.f32 0.0, %v2210
      %v2227 = vsub.f32 0.0, %v2211
      %v2228 = vsub.f32 0.0, %v2212
      %v2229 = vmul.f32 %v2213, 1.442695
      %v2230 = vpow.pop %v2229
      %v2231 = vmul.f32 %v2214, 1.442695
      %v2232 = vpow.pop %v2231
      %v2233 = vmul.f32 %v2215, 1.442695
      %v2234 = vpow.pop %v2233
      %v2235 = vmul.f32 %v2216, 1.442695
      %v2236 = vpow.pop %v2235
      %v2237 = vmul.f32 %v2217, 1.442695
      %v2238 = vpow.pop %v2237
      %v2239 = vmul.f32 %v2218, 1.442695
      %v2240 = vpow.pop %v2239
      %v2241 = vmul.f32 %v2219, 1.442695
      %v2242 = vpow.pop %v2241
      %v2243 = vmul.f32 %v2220, 1.442695
      %v2244 = vpow.pop %v2243
      %v2245 = vmul.f32 %v2221, 1.442695
      %v2246 = vpow.pop %v2245
      %v2247 = vmul.f32 %v2222, 1.442695
      %v2248 = vpow.pop %v2247
      %v2249 = vmul.f32 %v2223, 1.442695
      %v2250 = vpow.pop %v2249
      %v2251 = vmul.f32 %v2224, 1.442695
      %v2252 = vpow.pop %v2251
      %v2253 = vmul.f32 %v2225, 1.442695
      %v2254 = vpow.pop %v2253
      %v2255 = vmul.f32 %v2226, 1.442695
      %v2256 = vpow.pop %v2255
      %v2257 = vmul.f32 %v2227, 1.442695
      %v2258 = vpow.pop %v2257
      %v2259 = vmul.f32 %v2228, 1.442695
      %v2260 = vpow.pop %v2259
      %v2261 = vadd.f32 %v2230, 1.0
      %v2262 = vadd.f32 %v2232, 1.0
      %v2263 = vadd.f32 %v2234, 1.0
      %v2264 = vadd.f32 %v2236, 1.0
      %v2265 = vadd.f32 %v2238, 1.0
      %v2266 = vadd.f32 %v2240, 1.0
      %v2267 = vadd.f32 %v2242, 1.0
      %v2268 = vadd.f32 %v2244, 1.0
      %v2269 = vadd.f32 %v2246, 1.0
      %v2270 = vadd.f32 %v2248, 1.0
      %v2271 = vadd.f32 %v2250, 1.0
      %v2272 = vadd.f32 %v2252, 1.0
      %v2273 = vadd.f32 %v2254, 1.0
      %v2274 = vadd.f32 %v2256, 1.0
      %v2275 = vadd.f32 %v2258, 1.0
      %v2276 = vadd.f32 %v2260, 1.0
      %v2277 = vlog2.pop %v2261
      %v2278 = vmul.f32 %v2277, 0.6931472
      %v2279 = vlog2.pop %v2262
      %v2280 = vmul.f32 %v2279, 0.6931472
      %v2281 = vlog2.pop %v2263
      %v2282 = vmul.f32 %v2281, 0.6931472
      %v2283 = vlog2.pop %v2264
      %v2284 = vmul.f32 %v2283, 0.6931472
      %v2285 = vlog2.pop %v2265
      %v2286 = vmul.f32 %v2285, 0.6931472
      %v2287 = vlog2.pop %v2266
      %v2288 = vmul.f32 %v2287, 0.6931472
      %v2289 = vlog2.pop %v2267
      %v2290 = vmul.f32 %v2289, 0.6931472
      %v2291 = vlog2.pop %v2268
      %v2292 = vmul.f32 %v2291, 0.6931472
      %v2293 = vlog2.pop %v2269
      %v2294 = vmul.f32 %v2293, 0.6931472
      %v2295 = vlog2.pop %v2270
      %v2296 = vmul.f32 %v2295, 0.6931472
      %v2297 = vlog2.pop %v2271
      %v2298 = vmul.f32 %v2297, 0.6931472
      %v2299 = vlog2.pop %v2272
      %v2300 = vmul.f32 %v2299, 0.6931472
      %v2301 = vlog2.pop %v2273
      %v2302 = vmul.f32 %v2301, 0.6931472
      %v2303 = vlog2.pop %v2274
      %v2304 = vmul.f32 %v2303, 0.6931472
      %v2305 = vlog2.pop %v2275
      %v2306 = vmul.f32 %v2305, 0.6931472
      %v2307 = vlog2.pop %v2276
      %v2308 = vmul.f32 %v2307, 0.6931472
      %v2309 = vadd.f32 %v2181, %v2278
      %v2310 = vadd.f32 %v2182, %v2280
      %v2311 = vadd.f32 %v2183, %v2282
      %v2312 = vadd.f32 %v2184, %v2284
      %v2313 = vadd.f32 %v2185, %v2286
      %v2314 = vadd.f32 %v2186, %v2288
      %v2315 = vadd.f32 %v2187, %v2290
      %v2316 = vadd.f32 %v2188, %v2292
      %v2317 = vadd.f32 %v2189, %v2294
      %v2318 = vadd.f32 %v2190, %v2296
      %v2319 = vadd.f32 %v2191, %v2298
      %v2320 = vadd.f32 %v2192, %v2300
      %v2321 = vadd.f32 %v2193, %v2302
      %v2322 = vadd.f32 %v2194, %v2304
      %v2323 = vadd.f32 %v2195, %v2306
      %v2324 = vadd.f32 %v2196, %v2308
      %v2325 = vpack.c.bf16 %v2310, %v2309
      %v2326 = vpack.c.bf16 %v2312, %v2311
      %v2327 = vpack.c.bf16 %v2314, %v2313
      %v2328 = vpack.c.bf16 %v2316, %v2315
      %v2329 = vpack.c.bf16 %v2318, %v2317
      %v2330 = vpack.c.bf16 %v2320, %v2319
      %v2331 = vpack.c.bf16 %v2322, %v2321
      %v2332 = vpack.c.bf16 %v2324, %v2323
      %v2333 = vld [vmem:[%s10] sm:$0xff]
      %v2334 = vld [vmem:[%s10 + $0x8] sm:$0xff]
      %v2335 = vld [vmem:[%s10 + $0x10] sm:$0xff]
      %v2336 = vld [vmem:[%s10 + $0x18] sm:$0xff]
      %v2337 = vld [vmem:[%s10 + $0x20] sm:$0xff]
      %v2338 = vld [vmem:[%s10 + $0x28] sm:$0xff]
      %v2339 = vld [vmem:[%s10 + $0x30] sm:$0xff]
      %v2340 = vld [vmem:[%s10 + $0x38] sm:$0xff]
      %v2341 = vld [vmem:[%s10 + $0x40] sm:$0xff]
      %v2342 = vld [vmem:[%s10 + $0x48] sm:$0xff]
      %v2343 = vld [vmem:[%s10 + $0x50] sm:$0xff]
      %v2344 = vld [vmem:[%s10 + $0x58] sm:$0xff]
      %v2345 = vld [vmem:[%s10 + $0x60] sm:$0x33]
      %v2346 = vld [vmem:[%s11] sm:$0x3]
      %v2348 = vperm.slane %v2346, 0
      %v2349 = vperm.slane %v2346, 1
      %v2365 = vunpack.c.l.b16 %v2333
      %v2366 = vunpack.c.h.b16 %v2333
      %v2367 = vunpack.c.l.b16 %v2334
      %v2368 = vunpack.c.h.b16 %v2334
      %v2369 = vunpack.c.l.b16 %v2335
      %v2370 = vunpack.c.h.b16 %v2335
      %v2371 = vunpack.c.l.b16 %v2336
      %v2372 = vunpack.c.h.b16 %v2336
      %v2373 = vunpack.c.l.b16 %v2337
      %v2374 = vunpack.c.h.b16 %v2337
      %v2375 = vunpack.c.l.b16 %v2338
      %v2376 = vunpack.c.h.b16 %v2338
      %v2377 = vunpack.c.l.b16 %v2339
      %v2378 = vunpack.c.h.b16 %v2339
      %v2379 = vunpack.c.l.b16 %v2340
      %v2380 = vunpack.c.h.b16 %v2340
      %v2381 = vunpack.c.l.b16 %v2341
      %v2382 = vunpack.c.h.b16 %v2341
      %v2383 = vunpack.c.l.b16 %v2342
      %v2384 = vunpack.c.h.b16 %v2342
      %v2385 = vunpack.c.l.b16 %v2343
      %v2386 = vunpack.c.h.b16 %v2343
      %v2387 = vunpack.c.l.b16 %v2344
      %v2388 = vunpack.c.h.b16 %v2344
      %v2389 = vunpack.c.l.b16 %v2345
      %v2390 = vunpack.c.h.b16 %v2345
      %v2391 = vpack.c.b16 %v2367, %v2365
      %v2392 = vpack.c.b16 %v2368, %v2366
      %v2393 = vpack.c.b16 %v2371, %v2369
      %v2394 = vpack.c.b16 %v2372, %v2370
      %v2395 = vpack.c.b16 %v2375, %v2373
      %v2396 = vpack.c.b16 %v2376, %v2374
      %v2397 = vpack.c.b16 %v2379, %v2377
      %v2398 = vpack.c.b16 %v2380, %v2378
      %v2399 = vpack.c.b16 %v2383, %v2381
      %v2400 = vpack.c.b16 %v2384, %v2382
      %v2401 = vpack.c.b16 %v2387, %v2385
      %v2402 = vpack.c.b16 %v2388, %v2386
      %v2403 = vpack.c.b16 %v2389, %v2389
      %v2404 = vpack.c.b16 %v2390, %v2390
      %v2418 = vsel %vm1695, %v2325, 0
      %v2421 = vsel %vm1695, %v2326, 0
      %v2424 = vsel %vm1695, %v2327, 0
      %v2427 = vsel %vm1695, %v2328, 0
      %v2430 = vsel %vm1695, %v2329, 0
      %v2433 = vsel %vm1695, %v2330, 0
      %v2436 = vsel %vm1695, %v2331, 0
      %v2439 = vsel %vm1695, %v2332, 0
      %v2442 = vsel %vm1720, %v2403, 0
      %v2445 = vsel %vm1720, %v2404, 0
      %2447 = vmatpush.bf16.msra.mxu0 0
      %2448 = vmatpush.bf16.msra.mxu0 %v2442
      %2449 = vmatpush.bf16.msra.mxu0 %v2401
      %2450 = vmatpush.bf16.msra.mxu0 %v2399
      %2451 = vmatpush.bf16.msra.mxu0 %v2397
      %2452 = vmatpush.bf16.msra.mxu0 %v2395
      %2453 = vmatpush.bf16.msra.mxu0 %v2393
      %2454 = vmatpush.bf16.msra.mxu0 %v2391
      %2455 = vmatmul.bf16.gmra.mxu0 %v2418
      %v2456 = vpop.f32.mrf.mxu0
      %v2457 = vadd.f32 %v2348, %v2456
      %v2458 = vpop.f32.mrf.mxu0
      %v2459 = vadd.f32 %v2348, %v2458
      %2460 = vmatmul.bf16.gmra.mxu0 %v2421
      %v2461 = vpop.f32.mrf.mxu0
      %v2462 = vadd.f32 %v2348, %v2461
      %v2463 = vpop.f32.mrf.mxu0
      %v2464 = vadd.f32 %v2348, %v2463
      %2465 = vmatmul.bf16.gmra.mxu0 %v2424
      %v2466 = vpop.f32.mrf.mxu0
      %v2467 = vadd.f32 %v2348, %v2466
      %v2468 = vpop.f32.mrf.mxu0
      %v2469 = vadd.f32 %v2348, %v2468
      %2470 = vmatmul.bf16.gmra.mxu0 %v2427
      %v2471 = vpop.f32.mrf.mxu0
      %v2472 = vadd.f32 %v2348, %v2471
      %v2473 = vpop.f32.mrf.mxu0
      %v2474 = vadd.f32 %v2348, %v2473
      %2475 = vmatmul.bf16.gmra.mxu0 %v2430
      %v2476 = vpop.f32.mrf.mxu0
      %v2477 = vadd.f32 %v2348, %v2476
      %v2478 = vpop.f32.mrf.mxu0
      %v2479 = vadd.f32 %v2348, %v2478
      %2480 = vmatmul.bf16.gmra.mxu0 %v2433
      %v2481 = vpop.f32.mrf.mxu0
      %v2482 = vadd.f32 %v2348, %v2481
      %v2483 = vpop.f32.mrf.mxu0
      %v2484 = vadd.f32 %v2348, %v2483
      %2485 = vmatmul.bf16.gmra.mxu0 %v2436
      %v2486 = vpop.f32.mrf.mxu0
      %v2487 = vadd.f32 %v2348, %v2486
      %v2488 = vpop.f32.mrf.mxu0
      %v2489 = vadd.f32 %v2348, %v2488
      %2490 = vmatmul.bf16.gmra.mxu0 %v2439
      %v2491 = vpop.f32.mrf.mxu0
      %v2492 = vadd.f32 %v2348, %v2491
      %v2493 = vpop.f32.mrf.mxu0
      %v2494 = vadd.f32 %v2348, %v2493
      %2495 = vdwg.mxu0
      %2496 = vmatpush.bf16.msra.mxu0 0
      %2497 = vmatpush.bf16.msra.mxu0 %v2445
      %2498 = vmatpush.bf16.msra.mxu0 %v2402
      %2499 = vmatpush.bf16.msra.mxu0 %v2400
      %2500 = vmatpush.bf16.msra.mxu0 %v2398
      %2501 = vmatpush.bf16.msra.mxu0 %v2396
      %2502 = vmatpush.bf16.msra.mxu0 %v2394
      %2503 = vmatpush.bf16.msra.mxu0 %v2392
      %2504 = vmatmul.bf16.gmra.mxu0 %v2418
      %v2505 = vpop.f32.mrf.mxu0
      %v2506 = vadd.f32 %v2349, %v2505
      %v2507 = vpop.f32.mrf.mxu0
      %v2508 = vadd.f32 %v2349, %v2507
      %2509 = vmatmul.bf16.gmra.mxu0 %v2421
      %v2510 = vpop.f32.mrf.mxu0
      %v2511 = vadd.f32 %v2349, %v2510
      %v2512 = vpop.f32.mrf.mxu0
      %v2513 = vadd.f32 %v2349, %v2512
      %2514 = vmatmul.bf16.gmra.mxu0 %v2424
      %v2515 = vpop.f32.mrf.mxu0
      %v2516 = vadd.f32 %v2349, %v2515
      %v2517 = vpop.f32.mrf.mxu0
      %v2518 = vadd.f32 %v2349, %v2517
      %2519 = vmatmul.bf16.gmra.mxu0 %v2427
      %v2520 = vpop.f32.mrf.mxu0
      %v2521 = vadd.f32 %v2349, %v2520
      %v2522 = vpop.f32.mrf.mxu0
      %v2523 = vadd.f32 %v2349, %v2522
      %2524 = vmatmul.bf16.gmra.mxu0 %v2430
      %v2525 = vpop.f32.mrf.mxu0
      %v2526 = vadd.f32 %v2349, %v2525
      %v2527 = vpop.f32.mrf.mxu0
      %v2528 = vadd.f32 %v2349, %v2527
      %2529 = vmatmul.bf16.gmra.mxu0 %v2433
      %v2530 = vpop.f32.mrf.mxu0
      %v2531 = vadd.f32 %v2349, %v2530
      %v2532 = vpop.f32.mrf.mxu0
      %v2533 = vadd.f32 %v2349, %v2532
      %2534 = vmatmul.bf16.gmra.mxu0 %v2436
      %v2535 = vpop.f32.mrf.mxu0
      %v2536 = vadd.f32 %v2349, %v2535
      %v2537 = vpop.f32.mrf.mxu0
      %v2538 = vadd.f32 %v2349, %v2537
      %2539 = vmatmul.bf16.gmra.mxu0 %v2439
      %v2540 = vpop.f32.mrf.mxu0
      %v2541 = vadd.f32 %v2349, %v2540
      %v2542 = vpop.f32.mrf.mxu0
      %v2543 = vadd.f32 %v2349, %v2542
      %2544 = vdwg.mxu0
      %v2545 = vmax.f32 %v2457, 0.0
      %v2546 = vmax.f32 %v2506, 0.0
      %v2547 = vmax.f32 %v2459, 0.0
      %v2548 = vmax.f32 %v2508, 0.0
      %v2549 = vmax.f32 %v2462, 0.0
      %v2550 = vmax.f32 %v2511, 0.0
      %v2551 = vmax.f32 %v2464, 0.0
      %v2552 = vmax.f32 %v2513, 0.0
      %v2553 = vmax.f32 %v2467, 0.0
      %v2554 = vmax.f32 %v2516, 0.0
      %v2555 = vmax.f32 %v2469, 0.0
      %v2556 = vmax.f32 %v2518, 0.0
      %v2557 = vmax.f32 %v2472, 0.0
      %v2558 = vmax.f32 %v2521, 0.0
      %v2559 = vmax.f32 %v2474, 0.0
      %v2560 = vmax.f32 %v2523, 0.0
      %v2561 = vmax.f32 %v2477, 0.0
      %v2562 = vmax.f32 %v2526, 0.0
      %v2563 = vmax.f32 %v2479, 0.0
      %v2564 = vmax.f32 %v2528, 0.0
      %v2565 = vmax.f32 %v2482, 0.0
      %v2566 = vmax.f32 %v2531, 0.0
      %v2567 = vmax.f32 %v2484, 0.0
      %v2568 = vmax.f32 %v2533, 0.0
      %v2569 = vmax.f32 %v2487, 0.0
      %v2570 = vmax.f32 %v2536, 0.0
      %v2571 = vmax.f32 %v2489, 0.0
      %v2572 = vmax.f32 %v2538, 0.0
      %v2573 = vmax.f32 %v2492, 0.0
      %v2574 = vmax.f32 %v2541, 0.0
      %v2575 = vmax.f32 %v2494, 0.0
      %v2576 = vmax.f32 %v2543, 0.0
      %v2577 = vand.u32 2147483647, %v2457
      %v2578 = vand.u32 2147483647, %v2506
      %v2579 = vand.u32 2147483647, %v2459
      %v2580 = vand.u32 2147483647, %v2508
      %v2581 = vand.u32 2147483647, %v2462
      %v2582 = vand.u32 2147483647, %v2511
      %v2583 = vand.u32 2147483647, %v2464
      %v2584 = vand.u32 2147483647, %v2513
      %v2585 = vand.u32 2147483647, %v2467
      %v2586 = vand.u32 2147483647, %v2516
      %v2587 = vand.u32 2147483647, %v2469
      %v2588 = vand.u32 2147483647, %v2518
      %v2589 = vand.u32 2147483647, %v2472
      %v2590 = vand.u32 2147483647, %v2521
      %v2591 = vand.u32 2147483647, %v2474
      %v2592 = vand.u32 2147483647, %v2523
      %v2593 = vand.u32 2147483647, %v2477
      %v2594 = vand.u32 2147483647, %v2526
      %v2595 = vand.u32 2147483647, %v2479
      %v2596 = vand.u32 2147483647, %v2528
      %v2597 = vand.u32 2147483647, %v2482
      %v2598 = vand.u32 2147483647, %v2531
      %v2599 = vand.u32 2147483647, %v2484
      %v2600 = vand.u32 2147483647, %v2533
      %v2601 = vand.u32 2147483647, %v2487
      %v2602 = vand.u32 2147483647, %v2536
      %v2603 = vand.u32 2147483647, %v2489
      %v2604 = vand.u32 2147483647, %v2538
      %v2605 = vand.u32 2147483647, %v2492
      %v2606 = vand.u32 2147483647, %v2541
      %v2607 = vand.u32 2147483647, %v2494
      %v2608 = vand.u32 2147483647, %v2543
      %v2609 = vsub.f32 0.0, %v2577
      %v2610 = vsub.f32 0.0, %v2578
      %v2611 = vsub.f32 0.0, %v2579
      %v2612 = vsub.f32 0.0, %v2580
      %v2613 = vsub.f32 0.0, %v2581
      %v2614 = vsub.f32 0.0, %v2582
      %v2615 = vsub.f32 0.0, %v2583
      %v2616 = vsub.f32 0.0, %v2584
      %v2617 = vsub.f32 0.0, %v2585
      %v2618 = vsub.f32 0.0, %v2586
      %v2619 = vsub.f32 0.0, %v2587
      %v2620 = vsub.f32 0.0, %v2588
      %v2621 = vsub.f32 0.0, %v2589
      %v2622 = vsub.f32 0.0, %v2590
      %v2623 = vsub.f32 0.0, %v2591
      %v2624 = vsub.f32 0.0, %v2592
      %v2625 = vsub.f32 0.0, %v2593
      %v2626 = vsub.f32 0.0, %v2594
      %v2627 = vsub.f32 0.0, %v2595
      %v2628 = vsub.f32 0.0, %v2596
      %v2629 = vsub.f32 0.0, %v2597
      %v2630 = vsub.f32 0.0, %v2598
      %v2631 = vsub.f32 0.0, %v2599
      %v2632 = vsub.f32 0.0, %v2600
      %v2633 = vsub.f32 0.0, %v2601
      %v2634 = vsub.f32 0.0, %v2602
      %v2635 = vsub.f32 0.0, %v2603
      %v2636 = vsub.f32 0.0, %v2604
      %v2637 = vsub.f32 0.0, %v2605
      %v2638 = vsub.f32 0.0, %v2606
      %v2639 = vsub.f32 0.0, %v2607
      %v2640 = vsub.f32 0.0, %v2608
      %v2641 = vmul.f32 %v2609, 1.442695
      %v2642 = vpow.pop %v2641
      %v2643 = vmul.f32 %v2610, 1.442695
      %v2644 = vpow.pop %v2643
      %v2645 = vmul.f32 %v2611, 1.442695
      %v2646 = vpow.pop %v2645
      %v2647 = vmul.f32 %v2612, 1.442695
      %v2648 = vpow.pop %v2647
      %v2649 = vmul.f32 %v2613, 1.442695
      %v2650 = vpow.pop %v2649
      %v2651 = vmul.f32 %v2614, 1.442695
      %v2652 = vpow.pop %v2651
      %v2653 = vmul.f32 %v2615, 1.442695
      %v2654 = vpow.pop %v2653
      %v2655 = vmul.f32 %v2616, 1.442695
      %v2656 = vpow.pop %v2655
      %v2657 = vmul.f32 %v2617, 1.442695
      %v2658 = vpow.pop %v2657
      %v2659 = vmul.f32 %v2618, 1.442695
      %v2660 = vpow.pop %v2659
      %v2661 = vmul.f32 %v2619, 1.442695
      %v2662 = vpow.pop %v2661
      %v2663 = vmul.f32 %v2620, 1.442695
      %v2664 = vpow.pop %v2663
      %v2665 = vmul.f32 %v2621, 1.442695
      %v2666 = vpow.pop %v2665
      %v2667 = vmul.f32 %v2622, 1.442695
      %v2668 = vpow.pop %v2667
      %v2669 = vmul.f32 %v2623, 1.442695
      %v2670 = vpow.pop %v2669
      %v2671 = vmul.f32 %v2624, 1.442695
      %v2672 = vpow.pop %v2671
      %v2673 = vmul.f32 %v2625, 1.442695
      %v2674 = vpow.pop %v2673
      %v2675 = vmul.f32 %v2626, 1.442695
      %v2676 = vpow.pop %v2675
      %v2677 = vmul.f32 %v2627, 1.442695
      %v2678 = vpow.pop %v2677
      %v2679 = vmul.f32 %v2628, 1.442695
      %v2680 = vpow.pop %v2679
      %v2681 = vmul.f32 %v2629, 1.442695
      %v2682 = vpow.pop %v2681
      %v2683 = vmul.f32 %v2630, 1.442695
      %v2684 = vpow.pop %v2683
      %v2685 = vmul.f32 %v2631, 1.442695
      %v2686 = vpow.pop %v2685
      %v2687 = vmul.f32 %v2632, 1.442695
      %v2688 = vpow.pop %v2687
      %v2689 = vmul.f32 %v2633, 1.442695
      %v2690 = vpow.pop %v2689
      %v2691 = vmul.f32 %v2634, 1.442695
      %v2692 = vpow.pop %v2691
      %v2693 = vmul.f32 %v2635, 1.442695
      %v2694 = vpow.pop %v2693
      %v2695 = vmul.f32 %v2636, 1.442695
      %v2696 = vpow.pop %v2695
      %v2697 = vmul.f32 %v2637, 1.442695
      %v2698 = vpow.pop %v2697
      %v2699 = vmul.f32 %v2638, 1.442695
      %v2700 = vpow.pop %v2699
      %v2701 = vmul.f32 %v2639, 1.442695
      %v2702 = vpow.pop %v2701
      %v2703 = vmul.f32 %v2640, 1.442695
      %v2704 = vpow.pop %v2703
      %v2705 = vadd.f32 %v2642, 1.0
      %v2706 = vadd.f32 %v2644, 1.0
      %v2707 = vadd.f32 %v2646, 1.0
      %v2708 = vadd.f32 %v2648, 1.0
      %v2709 = vadd.f32 %v2650, 1.0
      %v2710 = vadd.f32 %v2652, 1.0
      %v2711 = vadd.f32 %v2654, 1.0
      %v2712 = vadd.f32 %v2656, 1.0
      %v2713 = vadd.f32 %v2658, 1.0
      %v2714 = vadd.f32 %v2660, 1.0
      %v2715 = vadd.f32 %v2662, 1.0
      %v2716 = vadd.f32 %v2664, 1.0
      %v2717 = vadd.f32 %v2666, 1.0
      %v2718 = vadd.f32 %v2668, 1.0
      %v2719 = vadd.f32 %v2670, 1.0
      %v2720 = vadd.f32 %v2672, 1.0
      %v2721 = vadd.f32 %v2674, 1.0
      %v2722 = vadd.f32 %v2676, 1.0
      %v2723 = vadd.f32 %v2678, 1.0
      %v2724 = vadd.f32 %v2680, 1.0
      %v2725 = vadd.f32 %v2682, 1.0
      %v2726 = vadd.f32 %v2684, 1.0
      %v2727 = vadd.f32 %v2686, 1.0
      %v2728 = vadd.f32 %v2688, 1.0
      %v2729 = vadd.f32 %v2690, 1.0
      %v2730 = vadd.f32 %v2692, 1.0
      %v2731 = vadd.f32 %v2694, 1.0
      %v2732 = vadd.f32 %v2696, 1.0
      %v2733 = vadd.f32 %v2698, 1.0
      %v2734 = vadd.f32 %v2700, 1.0
      %v2735 = vadd.f32 %v2702, 1.0
      %v2736 = vadd.f32 %v2704, 1.0
      %v2737 = vlog2.pop %v2705
      %v2738 = vmul.f32 %v2737, 0.6931472
      %v2739 = vlog2.pop %v2706
      %v2740 = vmul.f32 %v2739, 0.6931472
      %v2741 = vlog2.pop %v2707
      %v2742 = vmul.f32 %v2741, 0.6931472
      %v2743 = vlog2.pop %v2708
      %v2744 = vmul.f32 %v2743, 0.6931472
      %v2745 = vlog2.pop %v2709
      %v2746 = vmul.f32 %v2745, 0.6931472
      %v2747 = vlog2.pop %v2710
      %v2748 = vmul.f32 %v2747, 0.6931472
      %v2749 = vlog2.pop %v2711
      %v2750 = vmul.f32 %v2749, 0.6931472
      %v2751 = vlog2.pop %v2712
      %v2752 = vmul.f32 %v2751, 0.6931472
      %v2753 = vlog2.pop %v2713
      %v2754 = vmul.f32 %v2753, 0.6931472
      %v2755 = vlog2.pop %v2714
      %v2756 = vmul.f32 %v2755, 0.6931472
      %v2757 = vlog2.pop %v2715
      %v2758 = vmul.f32 %v2757, 0.6931472
      %v2759 = vlog2.pop %v2716
      %v2760 = vmul.f32 %v2759, 0.6931472
      %v2761 = vlog2.pop %v2717
      %v2762 = vmul.f32 %v2761, 0.6931472
      %v2763 = vlog2.pop %v2718
      %v2764 = vmul.f32 %v2763, 0.6931472
      %v2765 = vlog2.pop %v2719
      %v2766 = vmul.f32 %v2765, 0.6931472
      %v2767 = vlog2.pop %v2720
      %v2768 = vmul.f32 %v2767, 0.6931472
      %v2769 = vlog2.pop %v2721
      %v2770 = vmul.f32 %v2769, 0.6931472
      %v2771 = vlog2.pop %v2722
      %v2772 = vmul.f32 %v2771, 0.6931472
      %v2773 = vlog2.pop %v2723
      %v2774 = vmul.f32 %v2773, 0.6931472
      %v2775 = vlog2.pop %v2724
      %v2776 = vmul.f32 %v2775, 0.6931472
      %v2777 = vlog2.pop %v2725
      %v2778 = vmul.f32 %v2777, 0.6931472
      %v2779 = vlog2.pop %v2726
      %v2780 = vmul.f32 %v2779, 0.6931472
      %v2781 = vlog2.pop %v2727
      %v2782 = vmul.f32 %v2781, 0.6931472
      %v2783 = vlog2.pop %v2728
      %v2784 = vmul.f32 %v2783, 0.6931472
      %v2785 = vlog2.pop %v2729
      %v2786 = vmul.f32 %v2785, 0.6931472
      %v2787 = vlog2.pop %v2730
      %v2788 = vmul.f32 %v2787, 0.6931472
      %v2789 = vlog2.pop %v2731
      %v2790 = vmul.f32 %v2789, 0.6931472
      %v2791 = vlog2.pop %v2732
      %v2792 = vmul.f32 %v2791, 0.6931472
      %v2793 = vlog2.pop %v2733
      %v2794 = vmul.f32 %v2793, 0.6931472
      %v2795 = vlog2.pop %v2734
      %v2796 = vmul.f32 %v2795, 0.6931472
      %v2797 = vlog2.pop %v2735
      %v2798 = vmul.f32 %v2797, 0.6931472
      %v2799 = vlog2.pop %v2736
      %v2800 = vmul.f32 %v2799, 0.6931472
      %v2801 = vadd.f32 %v2545, %v2738
      %v2802 = vadd.f32 %v2546, %v2740
      %v2803 = vadd.f32 %v2547, %v2742
      %v2804 = vadd.f32 %v2548, %v2744
      %v2805 = vadd.f32 %v2549, %v2746
      %v2806 = vadd.f32 %v2550, %v2748
      %v2807 = vadd.f32 %v2551, %v2750
      %v2808 = vadd.f32 %v2552, %v2752
      %v2809 = vadd.f32 %v2553, %v2754
      %v2810 = vadd.f32 %v2554, %v2756
      %v2811 = vadd.f32 %v2555, %v2758
      %v2812 = vadd.f32 %v2556, %v2760
      %v2813 = vadd.f32 %v2557, %v2762
      %v2814 = vadd.f32 %v2558, %v2764
      %v2815 = vadd.f32 %v2559, %v2766
      %v2816 = vadd.f32 %v2560, %v2768
      %v2817 = vadd.f32 %v2561, %v2770
      %v2818 = vadd.f32 %v2562, %v2772
      %v2819 = vadd.f32 %v2563, %v2774
      %v2820 = vadd.f32 %v2564, %v2776
      %v2821 = vadd.f32 %v2565, %v2778
      %v2822 = vadd.f32 %v2566, %v2780
      %v2823 = vadd.f32 %v2567, %v2782
      %v2824 = vadd.f32 %v2568, %v2784
      %v2825 = vadd.f32 %v2569, %v2786
      %v2826 = vadd.f32 %v2570, %v2788
      %v2827 = vadd.f32 %v2571, %v2790
      %v2828 = vadd.f32 %v2572, %v2792
      %v2829 = vadd.f32 %v2573, %v2794
      %v2830 = vadd.f32 %v2574, %v2796
      %v2831 = vadd.f32 %v2575, %v2798
      %v2832 = vadd.f32 %v2576, %v2800
      %v2833 = vpack.c.bf16 %v2803, %v2801
      %v2834 = vpack.c.bf16 %v2804, %v2802
      %v2835 = vpack.c.bf16 %v2807, %v2805
      %v2836 = vpack.c.bf16 %v2808, %v2806
      %v2837 = vpack.c.bf16 %v2811, %v2809
      %v2838 = vpack.c.bf16 %v2812, %v2810
      %v2839 = vpack.c.bf16 %v2815, %v2813
      %v2840 = vpack.c.bf16 %v2816, %v2814
      %v2841 = vpack.c.bf16 %v2819, %v2817
      %v2842 = vpack.c.bf16 %v2820, %v2818
      %v2843 = vpack.c.bf16 %v2823, %v2821
      %v2844 = vpack.c.bf16 %v2824, %v2822
      %v2845 = vpack.c.bf16 %v2827, %v2825
      %v2846 = vpack.c.bf16 %v2828, %v2826
      %v2847 = vpack.c.bf16 %v2831, %v2829
      %v2848 = vpack.c.bf16 %v2832, %v2830
      %v2849 = vld [vmem:[%s12] sm:$0xf]
      %v2850 = vld [vmem:[%s12 + $0x4] sm:$0xf]
      %v2851 = vld [vmem:[%s12 + $0x8] sm:$0xf]
      %v2852 = vld [vmem:[%s12 + $0xc] sm:$0xf]
      %v2853 = vld [vmem:[%s12 + $0x10] sm:$0xf]
      %v2854 = vld [vmem:[%s12 + $0x14] sm:$0xf]
      %v2855 = vld [vmem:[%s12 + $0x18] sm:$0xf]
      %v2856 = vld [vmem:[%s12 + $0x1c] sm:$0xf]
      %v2857 = vld [vmem:[%s12 + $0x20] sm:$0xf]
      %v2858 = vld [vmem:[%s12 + $0x24] sm:$0xf]
      %v2859 = vld [vmem:[%s12 + $0x28] sm:$0xf]
      %v2860 = vld [vmem:[%s12 + $0x2c] sm:$0xf]
      %v2861 = vld [vmem:[%s12 + $0x30] sm:$0xf]
      %v2862 = vld [vmem:[%s12 + $0x34] sm:$0xf]
      %v2863 = vld [vmem:[%s12 + $0x38] sm:$0xf]
      %v2864 = vld [vmem:[%s12 + $0x3c] sm:$0xf]
      %v2865 = vld [vmem:[%s12 + $0x40] sm:$0xf]
      %v2866 = vld [vmem:[%s12 + $0x44] sm:$0xf]
      %v2867 = vld [vmem:[%s12 + $0x48] sm:$0xf]
      %v2868 = vld [vmem:[%s12 + $0x4c] sm:$0xf]
      %v2869 = vld [vmem:[%s12 + $0x50] sm:$0xf]
      %v2870 = vld [vmem:[%s12 + $0x54] sm:$0xf]
      %v2871 = vld [vmem:[%s12 + $0x58] sm:$0xf]
      %v2872 = vld [vmem:[%s12 + $0x5c] sm:$0xf]
      %v2873 = vld [vmem:[%s12 + $0x60] sm:$0xf]
      %v2874 = vld [vmem:[%s13] sm:$0x1]
      %v2876 = vperm.slane %v2874, 0
      %v2903 = vunpack.c.l.b16 %v2849
      %v2904 = vunpack.c.l.b16 %v2850
      %v2905 = vunpack.c.l.b16 %v2851
      %v2906 = vunpack.c.l.b16 %v2852
      %v2907 = vunpack.c.l.b16 %v2853
      %v2908 = vunpack.c.l.b16 %v2854
      %v2909 = vunpack.c.l.b16 %v2855
      %v2910 = vunpack.c.l.b16 %v2856
      %v2911 = vunpack.c.l.b16 %v2857
      %v2912 = vunpack.c.l.b16 %v2858
      %v2913 = vunpack.c.l.b16 %v2859
      %v2914 = vunpack.c.l.b16 %v2860
      %v2915 = vunpack.c.l.b16 %v2861
      %v2916 = vunpack.c.l.b16 %v2862
      %v2917 = vunpack.c.l.b16 %v2863
      %v2918 = vunpack.c.l.b16 %v2864
      %v2919 = vunpack.c.l.b16 %v2865
      %v2920 = vunpack.c.l.b16 %v2866
      %v2921 = vunpack.c.l.b16 %v2867
      %v2922 = vunpack.c.l.b16 %v2868
      %v2923 = vunpack.c.l.b16 %v2869
      %v2924 = vunpack.c.l.b16 %v2870
      %v2925 = vunpack.c.l.b16 %v2871
      %v2926 = vunpack.c.l.b16 %v2872
      %v2927 = vunpack.c.l.b16 %v2873
      %v2928 = vpack.c.b16 %v2904, %v2903
      %v2929 = vpack.c.b16 %v2906, %v2905
      %v2930 = vpack.c.b16 %v2908, %v2907
      %v2931 = vpack.c.b16 %v2910, %v2909
      %v2932 = vpack.c.b16 %v2912, %v2911
      %v2933 = vpack.c.b16 %v2914, %v2913
      %v2934 = vpack.c.b16 %v2916, %v2915
      %v2935 = vpack.c.b16 %v2918, %v2917
      %v2936 = vpack.c.b16 %v2920, %v2919
      %v2937 = vpack.c.b16 %v2922, %v2921
      %v2938 = vpack.c.b16 %v2924, %v2923
      %v2939 = vpack.c.b16 %v2926, %v2925
      %v2940 = vpack.c.b16 %v2927, %v2927
      %v2954 = vsel %vm1360, %v2834, 0
      %v2957 = vsel %vm1360, %v2836, 0
      %v2960 = vsel %vm1360, %v2838, 0
      %v2963 = vsel %vm1360, %v2840, 0
      %v2966 = vsel %vm1360, %v2842, 0
      %v2969 = vsel %vm1360, %v2844, 0
      %v2972 = vsel %vm1360, %v2846, 0
      %v2975 = vsel %vm1360, %v2848, 0
      %v2978 = vsel %vm1385, %v2940, 0
      %2980 = vmatpush.bf16.msra.mxu0 %v2935
      %2981 = vmatpush.bf16.msra.mxu0 %v2934
      %2982 = vmatpush.bf16.msra.mxu0 %v2933
      %2983 = vmatpush.bf16.msra.mxu0 %v2932
      %2984 = vmatpush.bf16.msra.mxu0 %v2931
      %2985 = vmatpush.bf16.msra.mxu0 %v2930
      %2986 = vmatpush.bf16.msra.mxu0 %v2929
      %2987 = vmatpush.bf16.msra.mxu0 %v2928
      %2988 = vmatmul.bf16.gmra.mxu0 %v2833
      %v2989 = vpop.f32.mrf.mxu0
      %v2990 = vadd.f32 %v2876, %v2989
      %v2991 = vpop.f32.mrf.mxu0
      %v2992 = vadd.f32 %v2876, %v2991
      %2993 = vmatmul.bf16.gmra.mxu0 %v2835
      %v2994 = vpop.f32.mrf.mxu0
      %v2995 = vadd.f32 %v2876, %v2994
      %v2996 = vpop.f32.mrf.mxu0
      %v2997 = vadd.f32 %v2876, %v2996
      %2998 = vmatmul.bf16.gmra.mxu0 %v2837
      %v2999 = vpop.f32.mrf.mxu0
      %v3000 = vadd.f32 %v2876, %v2999
      %v3001 = vpop.f32.mrf.mxu0
      %v3002 = vadd.f32 %v2876, %v3001
      %3003 = vmatmul.bf16.gmra.mxu0 %v2839
      %v3004 = vpop.f32.mrf.mxu0
      %v3005 = vadd.f32 %v2876, %v3004
      %v3006 = vpop.f32.mrf.mxu0
      %v3007 = vadd.f32 %v2876, %v3006
      %3008 = vmatmul.bf16.gmra.mxu0 %v2841
      %v3009 = vpop.f32.mrf.mxu0
      %v3010 = vadd.f32 %v2876, %v3009
      %v3011 = vpop.f32.mrf.mxu0
      %v3012 = vadd.f32 %v2876, %v3011
      %3013 = vmatmul.bf16.gmra.mxu0 %v2843
      %v3014 = vpop.f32.mrf.mxu0
      %v3015 = vadd.f32 %v2876, %v3014
      %v3016 = vpop.f32.mrf.mxu0
      %v3017 = vadd.f32 %v2876, %v3016
      %3018 = vmatmul.bf16.gmra.mxu0 %v2845
      %v3019 = vpop.f32.mrf.mxu0
      %v3020 = vadd.f32 %v2876, %v3019
      %v3021 = vpop.f32.mrf.mxu0
      %v3022 = vadd.f32 %v2876, %v3021
      %3023 = vmatmul.bf16.gmra.mxu0 %v2847
      %v3024 = vpop.f32.mrf.mxu0
      %v3025 = vadd.f32 %v2876, %v3024
      %v3026 = vpop.f32.mrf.mxu0
      %v3027 = vadd.f32 %v2876, %v3026
      %3028 = vdwg.mxu0
      %3029 = vmatpush.bf16.msra.mxu0 0
      %3030 = vmatpush.bf16.msra.mxu0 0
      %3031 = vmatpush.bf16.msra.mxu0 0
      %3032 = vmatpush.bf16.msra.mxu0 %v2978
      %3033 = vmatpush.bf16.msra.mxu0 %v2939
      %3034 = vmatpush.bf16.msra.mxu0 %v2938
      %3035 = vmatpush.bf16.msra.mxu0 %v2937
      %3036 = vmatpush.bf16.msra.mxu0 %v2936
      %3037 = vmatmul.bf16.gmra.mxu0 %v2954
      %v3038 = vpop.f32.mrf.mxu0
      %v3039 = vadd.f32 %v2990, %v3038
      %v3040 = vpop.f32.mrf.mxu0
      %v3041 = vadd.f32 %v2992, %v3040
      %3042 = vmatmul.bf16.gmra.mxu0 %v2957
      %v3043 = vpop.f32.mrf.mxu0
      %v3044 = vadd.f32 %v2995, %v3043
      %v3045 = vpop.f32.mrf.mxu0
      %v3046 = vadd.f32 %v2997, %v3045
      %3047 = vmatmul.bf16.gmra.mxu0 %v2960
      %v3048 = vpop.f32.mrf.mxu0
      %v3049 = vadd.f32 %v3000, %v3048
      %v3050 = vpop.f32.mrf.mxu0
      %v3051 = vadd.f32 %v3002, %v3050
      %3052 = vmatmul.bf16.gmra.mxu0 %v2963
      %v3053 = vpop.f32.mrf.mxu0
      %v3054 = vadd.f32 %v3005, %v3053
      %v3055 = vpop.f32.mrf.mxu0
      %v3056 = vadd.f32 %v3007, %v3055
      %3057 = vmatmul.bf16.gmra.mxu0 %v2966
      %v3058 = vpop.f32.mrf.mxu0
      %v3059 = vadd.f32 %v3010, %v3058
      %v3060 = vpop.f32.mrf.mxu0
      %v3061 = vadd.f32 %v3012, %v3060
      %3062 = vmatmul.bf16.gmra.mxu0 %v2969
      %v3063 = vpop.f32.mrf.mxu0
      %v3064 = vadd.f32 %v3015, %v3063
      %v3065 = vpop.f32.mrf.mxu0
      %v3066 = vadd.f32 %v3017, %v3065
      %3067 = vmatmul.bf16.gmra.mxu0 %v2972
      %v3068 = vpop.f32.mrf.mxu0
      %v3069 = vadd.f32 %v3020, %v3068
      %v3070 = vpop.f32.mrf.mxu0
      %v3071 = vadd.f32 %v3022, %v3070
      %3072 = vmatmul.bf16.gmra.mxu0 %v2975
      %v3073 = vpop.f32.mrf.mxu0
      %v3074 = vadd.f32 %v3025, %v3073
      %v3075 = vpop.f32.mrf.mxu0
      %v3076 = vadd.f32 %v3027, %v3075
      %3077 = vdwg.mxu0
      %v3078 = vlaneseq
      %v3079 = vand.u32 %v3078, 127
      %vm3080 = vcmp.ge.s32.totalorder %v3079, 5
      %vm3081 = vcmp.lt.s32.totalorder %v3079, 7
      %vm3082 = vmand %vm3080, %vm3081
      %v3083 = vsel %vm3082, %v1774, %v1734
      %v3084 = vsel %vm3082, %v1776, %v1736
      %v3085 = vsel %vm3082, %v1778, %v1739
      %v3086 = vsel %vm3082, %v1780, %v1741
      %v3087 = vsel %vm3082, %v1782, %v1744
      %v3088 = vsel %vm3082, %v1784, %v1746
      %v3089 = vsel %vm3082, %v1786, %v1749
      %v3090 = vsel %vm3082, %v1788, %v1751
      %v3091 = vsel %vm3082, %v1790, %v1754
      %v3092 = vsel %vm3082, %v1792, %v1756
      %v3093 = vsel %vm3082, %v1794, %v1759
      %v3094 = vsel %vm3082, %v1796, %v1761
      %v3095 = vsel %vm3082, %v1798, %v1764
      %v3096 = vsel %vm3082, %v1800, %v1766
      %v3097 = vsel %vm3082, %v1802, %v1769
      %v3098 = vsel %vm3082, %v1804, %v1771
      %v3099 = vadd.f32 %v3039, %v3083
      %v3100 = vadd.f32 %v3041, %v3084
      %v3101 = vadd.f32 %v3044, %v3085
      %v3102 = vadd.f32 %v3046, %v3086
      %v3103 = vadd.f32 %v3049, %v3087
      %v3104 = vadd.f32 %v3051, %v3088
      %v3105 = vadd.f32 %v3054, %v3089
      %v3106 = vadd.f32 %v3056, %v3090
      %v3107 = vadd.f32 %v3059, %v3091
      %v3108 = vadd.f32 %v3061, %v3092
      %v3109 = vadd.f32 %v3064, %v3093
      %v3110 = vadd.f32 %v3066, %v3094
      %v3111 = vadd.f32 %v3069, %v3095
      %v3112 = vadd.f32 %v3071, %v3096
      %v3113 = vadd.f32 %v3074, %v3097
      %v3114 = vadd.f32 %v3076, %v3098
      %3115 = vst [vmem:[%s491] sm:$0xff] %v3099
      %3116 = vst [vmem:[%s491 + $0x8] sm:$0xff] %v3100
      %3117 = vst [vmem:[%s491 + $0x10] sm:$0xff] %v3101
      %3118 = vst [vmem:[%s491 + $0x18] sm:$0xff] %v3102
      %3119 = vst [vmem:[%s491 + $0x20] sm:$0xff] %v3103
      %3120 = vst [vmem:[%s491 + $0x28] sm:$0xff] %v3104
      %3121 = vst [vmem:[%s491 + $0x30] sm:$0xff] %v3105
      %3122 = vst [vmem:[%s491 + $0x38] sm:$0xff] %v3106
      %3123 = vst [vmem:[%s491 + $0x40] sm:$0xff] %v3107
      %3124 = vst [vmem:[%s491 + $0x48] sm:$0xff] %v3108
      %3125 = vst [vmem:[%s491 + $0x50] sm:$0xff] %v3109
      %3126 = vst [vmem:[%s491 + $0x58] sm:$0xff] %v3110
      %3127 = vst [vmem:[%s491 + $0x60] sm:$0xff] %v3111
      %3128 = vst [vmem:[%s491 + $0x68] sm:$0xff] %v3112
      %3129 = vst [vmem:[%s491 + $0x70] sm:$0xff] %v3113
      %3130 = vst [vmem:[%s491 + $0x78] sm:$0xff] %v3114
      %s3131 = smul.u32 16, %s25
      %p3132 = scmp.lt.s32.totalorder %s3131, 31
      %s3133 = scalar_select %p3132, %s3131, 31
      %s3134 = smul.addr %s3133, 8
      %s3135 = scalar_lea.vmem %s14, %s3134
      // Predicated region
      $region77: #{vae_forward.1} parent=75 // pred_check
        %p3136 = pneg %p347
      $region78: #{vae_forward.1} parent=75 // pred_check_branch
        %3138 = sbr.rel (%p3136) target = $region80
      $region79: #{vae_forward.1} parent=75 // pred_region
        %s3139 = smul.u32 16, %s25
      $region80: #{vae_forward.1} parent=75 // pred_fallthru
        _
    $region76: #{vae_forward.1} parent=5 // pred_fallthru
      _
    %p3140 = scmp.le.s32.totalorder 2, %s20
    // Predicated region
    $region81: #{vae_forward.1} parent=5 // pred_check
      %p3141 = pneg %p3140
    $region82: #{vae_forward.1} parent=5 // pred_check_branch
      %3143 = sbr.rel (%p3141) target = $region84
    $region83: #{vae_forward.1} parent=5 // pred_region
      %s3144 = ssub.s32 %s20, 2
      // Predicated region
      $region85: #{vae_forward.1} parent=83 // pred_check
        %p3145 = pneg %p353
      $region86: #{vae_forward.1} parent=83 // pred_check_branch
        %3147 = sbr.rel (%p3145) target = $region88
      $region87: #{vae_forward.1} parent=83 // pred_region
        %s3148 = smul.u32 16, %s26
        %p3149 = scmp.lt.s32.totalorder %s3148, 31
        %s3150 = scalar_select %p3149, %s3148, 31
        %s3151 = smul.addr %s3150, 8
        %s3152 = scalar_lea.vmem %s14, %s3151
      $region88: #{vae_forward.1} parent=83 // pred_fallthru
        _
    $region84: #{vae_forward.1} parent=5 // pred_fallthru
      _
  $region6: #{vae_forward.1} parent=0 // loop_footer
    %s24 = sadd.s32 1, %s20
  $region7: #{vae_forward.1} parent=0 // loop_footer_branch
    %19 = sbr.rel target = $region3
  $region8: #{vae_forward.1} parent=0 // loop_exit
    _

</llo_original>
